<compile_context>
chip_gen: v5e
topology: v5e:2x2
jax: 0.10.0
libtpu: 0.0.40
codegen_flags: <defaults>
</compile_context>

<pallas_src>
import functools

import jax
import jax.numpy as jnp
from jax import lax
from jax.experimental import pallas as pl
from jax.experimental.pallas import tpu as pltpu

HIDDEN = 128
IN_FEATS = 4
FEAT_AUG = IN_FEATS + 1          # +1 ones column carrying the folded (b_ih + b_hh) bias
CHUNK_T_MAX = 128                # upper bound on timesteps per grid step


def _sigmoid_via_tanh(x):
    # sigmoid(x) == 0.5 * tanh(0.5 * x) + 0.5 : one EUP op + trivial VPU work.
    return 0.5 * jnp.tanh(0.5 * x) + 0.5


def _lstm_disc_kernel(x_ref, wih_ref, whh_ref, wfc_ref, bfc_ref,
                      out_ref, h_sc, c_sc, g_sc,
                      *, chunk_t, rem_t, bb, unroll):
    chunk = pl.program_id(1)
    n_chunks = pl.num_programs(1)

    @pl.when(chunk == 0)
    def _init():
        h_sc[...] = jnp.zeros_like(h_sc)
        c_sc[...] = jnp.zeros_like(c_sc)

    # Chunk-level input projection: one bf16 MXU matmul
    #   (chunk_t*bb, F+1) @ (F+1, 4H) -> f32 gate slab (bias rides the ones column).
    # TODO(synk): double-buffer g_sc and prefetch chunk c+1's x with a manual DMA so
    # this prologue overlaps chunk c's recurrence instead of preceding it.
    g_sc[...] = jnp.dot(x_ref[...], wih_ref[...],
                        preferred_element_type=jnp.float32)

    whh = whh_ref[...]                      # bf16 (H, 4H), hoisted out of the time loop
    # TODO(synk): hold W_hh weight-stationary via pltpu.matmul_push_rhs/acc_lhs/pop if
    # the bundle dump shows Mosaic re-pushing it into the MXU every step.

    def step(s, carry):
        h, c = carry
        row = pl.multiple_of(s * bb, bb)    # bb is a multiple of 8 (f32 sublane tile)
        gates = g_sc[pl.ds(row, bb), :] + jnp.dot(
            h.astype(jnp.bfloat16), whh, preferred_element_type=jnp.float32)
        i_g = _sigmoid_via_tanh(gates[:, 0 * HIDDEN:1 * HIDDEN])
        f_g = _sigmoid_via_tanh(gates[:, 1 * HIDDEN:2 * HIDDEN])
        g_g = jnp.tanh(gates[:, 2 * HIDDEN:3 * HIDDEN])
        o_g = _sigmoid_via_tanh(gates[:, 3 * HIDDEN:4 * HIDDEN])
        c_new = f_g * c + i_g * g_g
        h_new = o_g * jnp.tanh(c_new)
        return h_new, c_new

    def run(n_steps):
        h, c = lax.fori_loop(0, n_steps, step, (h_sc[...], c_sc[...]),
                             unroll=max(1, min(unroll, n_steps)))
        h_sc[...] = h
        c_sc[...] = c

    if rem_t == chunk_t:                    # T divides evenly: every chunk is full
        run(chunk_t)
    else:                                   # padded timesteps exist only in the last
        @pl.when(chunk < n_chunks - 1)      # chunk; run a shorter *static* loop there
        def _full():                        # instead of masking every step everywhere
            run(chunk_t)

        @pl.when(chunk == n_chunks - 1)
        def _tail():
            run(rem_t)

    @pl.when(chunk == n_chunks - 1)
    def _finalize():
        logits = (jnp.dot(h_sc[...], wfc_ref[...],
                          preferred_element_type=jnp.float32) + bfc_ref[...])
        out_ref[...] = _sigmoid_via_tanh(logits)


@functools.lru_cache(maxsize=1)
def _vmem_budget_bytes():
    cap = 64 * 1024 * 1024                  # safe default = v7x physical per-TC VMEM
    try:
        cap = int(getattr(pltpu.get_tpu_info(), "vmem_capacity_bytes", cap))
    except Exception:
        pass
    # ~3/4 of physical: ~96 MiB on v5e/v6e (128 MiB chips), ~48 MiB on v7x (64 MiB).
    return int(min(max(cap * 3 // 4, 32 * 1024 * 1024), 100 * 1024 * 1024))


@jax.jit
def dna_discriminator(x, w_ih, w_hh, b_ih, b_hh, w_fc, b_fc):
    """x: (B, T, 4) float32  ->  (B, 1) float32 in (0, 1)."""
    B, T, F = x.shape
    assert F == IN_FEATS and T >= 1

    # --- batch padding / batch-block split (v7x megacore) ------------------------
    n_bblk = 2 if B >= 256 else 1           # 2 TCs on v7x; size-1 no-op on v5e/v6e
    align = 8 * n_bblk
    bp = max(align, ((B + align - 1) // align) * align)
    bb = bp // n_bblk                       # batch rows per block (multiple of 8)

    # --- chunk length from the per-generation VMEM budget ------------------------
    budget = _vmem_budget_bytes()
    per_row = 4 * HIDDEN * 4                # f32 gate-slab row
    per_row += 2 * 128 * 2                  # bf16 x block row (lane-padded), x2 buffers
    cap_t = max(8, (budget - 2 * 1024 * 1024) // (bb * per_row))
    chunk_t = int(min(T, CHUNK_T_MAX, cap_t))
    n_chunks = pl.cdiv(T, chunk_t)
    t_pad = n_chunks * chunk_t
    rem_t = T - (n_chunks - 1) * chunk_t    # valid steps in the final chunk (static)

    # unroll only while it is register-free (per-step gates ~ bb/8 * 4 vregs)
    if bb <= 16:
        unroll = 8
    elif bb <= 32:
        unroll = 4
    elif bb <= 64:
        unroll = 2
    else:
        unroll = 1

    # --- x: time-major, ones column for bias, fold (chunk_t, bb) rows, bf16 ------
    ones = jnp.ones((B, T, 1), jnp.float32)
    x_aug = jnp.concatenate([x.astype(jnp.float32), ones], axis=-1)   # (B, T, 5)
    x_tm = jnp.transpose(x_aug, (1, 0, 2))                            # (T, B, 5)
    x_tm = jnp.pad(x_tm, ((0, t_pad - T), (0, bp - B), (0, 0)))       # (T_pad, Bp, 5)
    x_blk = x_tm.reshape(n_chunks, chunk_t, n_bblk, bb, FEAT_AUG)
    x_blk = jnp.transpose(x_blk, (2, 0, 1, 3, 4))
    x_blk = x_blk.reshape(n_bblk, n_chunks, chunk_t * bb, FEAT_AUG)
    x_blk = x_blk.astype(jnp.bfloat16)
    # TODO(synk): present x lane-dense ((..., FEAT_AUG, chunk_t*bb)) once the
    # transposed-LHS dot_general lowering is verified; its lane-sparse VMEM cost is
    # already included in the chunk_t budget above.

    # --- weights: bf16 MXU operands, bias folded as an extra W_ih row ------------
    wih_aug = jnp.concatenate(
        [jnp.transpose(w_ih).astype(jnp.float32),
         (b_ih + b_hh).astype(jnp.float32)[None, :]], axis=0)         # (5, 4H)
    wih_aug = wih_aug.astype(jnp.bfloat16)
    whh_t = jnp.transpose(w_hh).astype(jnp.float32).astype(jnp.bfloat16)   # (H, 4H)
    wfc_t = jnp.transpose(w_fc).astype(jnp.float32)                   # (H, 1)
    bfc = b_fc.astype(jnp.float32)[None, :]                           # (1, 1)

    kernel = functools.partial(_lstm_disc_kernel, chunk_t=chunk_t,
                               rem_t=rem_t, bb=bb, unroll=unroll)

    grid_spec = pltpu.PrefetchScalarGridSpec(
        num_scalar_prefetch=0,
        grid=(n_bblk, n_chunks),
        in_specs=[
            # x chunk (leading block/chunk dims squeezed out of the kernel ref)
            pl.BlockSpec((None, None, chunk_t * bb, FEAT_AUG),
                         lambda b, c: (b, c, 0, 0)),
            pl.BlockSpec((FEAT_AUG, 4 * HIDDEN), lambda b, c: (0, 0)),   # [W_ih; b]^T
            pl.BlockSpec((HIDDEN, 4 * HIDDEN), lambda b, c: (0, 0)),     # W_hh^T
            pl.BlockSpec((HIDDEN, 1), lambda b, c: (0, 0)),              # W_fc^T
            pl.BlockSpec((1, 1), lambda b, c: (0, 0)),                   # b_fc
        ],
        out_specs=pl.BlockSpec((bb, 1), lambda b, c: (b, 0)),
        scratch_shapes=[
            pltpu.VMEM((bb, HIDDEN), jnp.float32),                # h state
            pltpu.VMEM((bb, HIDDEN), jnp.float32),                # c state
            pltpu.VMEM((chunk_t * bb, 4 * HIDDEN), jnp.float32),  # gate slab
        ],
    )

    out = pl.pallas_call(
        kernel,
        out_shape=jax.ShapeDtypeStruct((bp, 1), jnp.float32),
        grid_spec=grid_spec,
        compiler_params=pltpu.CompilerParams(
            dimension_semantics=("parallel", "arbitrary"),  # batch blocks || time chunks
            vmem_limit_bytes=budget,
        ),
    )(x_blk, wih_aug, whh_t, wfc_t, bfc)
    return out[:B]


def init_params(key):
    """Deterministic init mimicking PyTorch's U(-1/sqrt(H), 1/sqrt(H))."""
    ks = jax.random.split(key, 6)
    bound = 1.0 / jnp.sqrt(jnp.float32(HIDDEN))
    u = lambda k, shape: jax.random.uniform(k, shape, jnp.float32, -bound, bound)
    w_ih = u(ks[0], (4 * HIDDEN, IN_FEATS))   # PyTorch weight_ih_l0
    w_hh = u(ks[1], (4 * HIDDEN, HIDDEN))     # PyTorch weight_hh_l0
    b_ih = u(ks[2], (4 * HIDDEN,))
    b_hh = u(ks[3], (4 * HIDDEN,))
    w_fc = u(ks[4], (1, HIDDEN))              # PyTorch Linear weight
    b_fc = u(ks[5], (1,))
    return w_ih, w_hh, b_ih, b_hh, w_fc, b_fc


def _reference(x, w_ih, w_hh, b_ih, b_hh, w_fc, b_fc):
    """Pure-JAX f32 reference for sanity checking."""
    B, T, _ = x.shape
    h = jnp.zeros((B, HIDDEN), jnp.float32)
    c = jnp.zeros((B, HIDDEN), jnp.float32)

    def step(carry, x_t):
        h, c = carry
        g = x_t @ w_ih.T + h @ w_hh.T + b_ih + b_hh
        i = jax.nn.sigmoid(g[:, 0 * HIDDEN:1 * HIDDEN])
        f = jax.nn.sigmoid(g[:, 1 * HIDDEN:2 * HIDDEN])
        gg = jnp.tanh(g[:, 2 * HIDDEN:3 * HIDDEN])
        o = jax.nn.sigmoid(g[:, 3 * HIDDEN:4 * HIDDEN])
        c = f * c + i * gg
        h = o * jnp.tanh(c)
        return (h, c), None

    (h, c), _ = jax.lax.scan(step, (h, c), jnp.transpose(x, (1, 0, 2)))
    return jax.nn.sigmoid(h @ w_fc.T + b_fc)


if __name__ == "__main__":
    key = jax.random.PRNGKey(0)
    kx, kp = jax.random.split(key)

    B, T = 2, 8  # small shapes: batch=2, seq_len=8, 4 one-hot DNA channels
    x = jax.random.uniform(kx, (B, T, IN_FEATS), jnp.float32)

    params = init_params(kp)
    out = dna_discriminator(x, *params)
    out = jax.block_until_ready(out)

    ref = _reference(x, *params)
    assert out.shape == (B, 1)
    # bf16 MXU operands on the recurrent path -> loose-but-meaningful tolerance.
    assert jnp.allclose(out, ref, atol=1e-2, rtol=1e-2), (out, ref)
    print("KERNEL_OK")
</pallas_src>

<mosaic_0001>
module attributes {stable_mosaic.version = 11 : i64} {
  func.func @_lstm_disc_kernel(%arg0: i32, %arg1: i32, %arg2: memref<1x1x64x5xbf16, #tpu.memory_space<vmem>>, %arg3: memref<5x512xbf16, #tpu.memory_space<vmem>>, %arg4: memref<128x512xbf16, #tpu.memory_space<vmem>>, %arg5: memref<128x1xf32, #tpu.memory_space<vmem>>, %arg6: memref<1x1xf32, #tpu.memory_space<vmem>>, %arg7: memref<8x1xf32, #tpu.memory_space<vmem>>, %arg8: memref<8x128xf32, #tpu.memory_space<vmem>>, %arg9: memref<8x128xf32, #tpu.memory_space<vmem>>, %arg10: memref<64x512xf32, #tpu.memory_space<vmem>>) attributes {dimension_semantics = [#tpu.dimension_semantics<parallel>, #tpu.dimension_semantics<arbitrary>], iteration_bounds = array<i64: 1, 1>, scalar_prefetch = 0 : i64, scratch_operands = 3 : i64, tpu.core_type = #tpu.core_type<tc>, window_params = [{transform_indices = @transform_0, window_bounds = array<i64: 1, 1, 64, 5>}, {pipeline_mode = #tpu.pipeline_mode<synchronous>, transform_indices = @transform_1, window_bounds = array<i64: 5, 512>}, {pipeline_mode = #tpu.pipeline_mode<synchronous>, transform_indices = @transform_2, window_bounds = array<i64: 128, 512>}, {pipeline_mode = #tpu.pipeline_mode<synchronous>, transform_indices = @transform_3, window_bounds = array<i64: 128, 1>}, {pipeline_mode = #tpu.pipeline_mode<synchronous>, transform_indices = @transform_4, window_bounds = array<i64: 1, 1>}, {transform_indices = @transform_5, window_bounds = array<i64: 8, 1>}]} {
    %c0_i32 = arith.constant 0 : i32
    %0 = arith.cmpi eq, %arg1, %c0_i32 : i32
    %1 = arith.extui %0 : i1 to i32
    %c0_i32_0 = arith.constant 0 : i32
    %2 = arith.cmpi ne, %1, %c0_i32_0 : i32
    scf.if %2 {
      %cst_117 = arith.constant 0.000000e+00 : f32
      %320 = vector.broadcast %cst_117 : f32 to vector<8x128xf32>
      %c0_118 = arith.constant 0 : index
      %c0_119 = arith.constant 0 : index
      %321 = vector.load %arg8[%c0_118, %c0_119] : memref<8x128xf32, #tpu.memory_space<vmem>>, vector<8x128xf32>
      tpu.vector_store %arg8[%c0_118, %c0_119], %320 {strides = array<i32>} : memref<8x128xf32, #tpu.memory_space<vmem>>, vector<8x128xf32>,
      %cst_120 = arith.constant 0.000000e+00 : f32
      %322 = vector.broadcast %cst_120 : f32 to vector<8x128xf32>
      %c0_121 = arith.constant 0 : index
      %c0_122 = arith.constant 0 : index
      %323 = vector.load %arg9[%c0_121, %c0_122] : memref<8x128xf32, #tpu.memory_space<vmem>>, vector<8x128xf32>
      tpu.vector_store %arg9[%c0_121, %c0_122], %322 {strides = array<i32>} : memref<8x128xf32, #tpu.memory_space<vmem>>, vector<8x128xf32>,
    } else {
    }
    %c0 = arith.constant 0 : index
    %c0_1 = arith.constant 0 : index
    %c0_2 = arith.constant 0 : index
    %c0_3 = arith.constant 0 : index
    %3 = vector.load %arg2[%c0, %c0_1, %c0_2, %c0_3] : memref<1x1x64x5xbf16, #tpu.memory_space<vmem>>, vector<1x1x64x5xbf16>
    %4 = vector.shape_cast %3 : vector<1x1x64x5xbf16> to vector<64x5xbf16>
    %c0_4 = arith.constant 0 : index
    %c0_5 = arith.constant 0 : index
    %5 = vector.load %arg3[%c0_4, %c0_5] : memref<5x512xbf16, #tpu.memory_space<vmem>>, vector<5x512xbf16>
    %cst = arith.constant dense<0.000000e+00> : vector<64x512xf32>
    %6 = tpu.matmul %4, %5, %cst {dimension_numbers = #tpu.dot_dimension_numbers<[1], [0], [0], [1], [0, 0, 1, 1], [], []>} : vector<64x5xbf16>, vector<5x512xbf16>, vector<64x512xf32> -> vector<64x512xf32>
    %c0_6 = arith.constant 0 : index
    %c0_7 = arith.constant 0 : index
    %7 = vector.load %arg10[%c0_6, %c0_7] : memref<64x512xf32, #tpu.memory_space<vmem>>, vector<64x512xf32>
    tpu.vector_store %arg10[%c0_6, %c0_7], %6 {strides = array<i32>} : memref<64x512xf32, #tpu.memory_space<vmem>>, vector<64x512xf32>,
    %c0_8 = arith.constant 0 : index
    %c0_9 = arith.constant 0 : index
    %8 = vector.load %arg4[%c0_8, %c0_9] : memref<128x512xbf16, #tpu.memory_space<vmem>>, vector<128x512xbf16>
    %c0_10 = arith.constant 0 : index
    %c0_11 = arith.constant 0 : index
    %9 = vector.load %arg8[%c0_10, %c0_11] : memref<8x128xf32, #tpu.memory_space<vmem>>, vector<8x128xf32>
    %c0_12 = arith.constant 0 : index
    %c0_13 = arith.constant 0 : index
    %10 = vector.load %arg9[%c0_12, %c0_13] : memref<8x128xf32, #tpu.memory_space<vmem>>, vector<8x128xf32>
    %c0_i32_14 = arith.constant 0 : i32
    %c8_i32 = arith.constant 8 : i32
    %11 = arith.muli %c0_i32_14, %c8_i32 : i32
    %12 = tpu.assume_multiple %11, 8 : i32
    %13 = arith.index_cast %12 : i32 to index
    %c0_15 = arith.constant 0 : index
    %14 = vector.load %arg10[%13, %c0_15] : memref<64x512xf32, #tpu.memory_space<vmem>>, vector<8x512xf32>
    %15 = arith.truncf %9 : vector<8x128xf32> to vector<8x128xbf16>
    %cst_16 = arith.constant dense<0.000000e+00> : vector<8x512xf32>
    %16 = tpu.matmul %15, %8, %cst_16 {dimension_numbers = #tpu.dot_dimension_numbers<[1], [0], [0], [1], [0, 0, 1, 1], [], []>} : vector<8x128xbf16>, vector<128x512xbf16>, vector<8x512xf32> -> vector<8x512xf32>
    %17 = arith.addf %14, %16 : vector<8x512xf32>
    %18 = vector.extract_strided_slice %17 {offsets = [0, 0], sizes = [8, 128], strides = [1, 1]} : vector<8x512xf32> to vector<8x128xf32>
    %cst_17 = arith.constant 5.000000e-01 : f32
    %19 = vector.broadcast %cst_17 : f32 to vector<8x128xf32>
    %20 = arith.mulf %19, %18 : vector<8x128xf32>
    %21 = math.tanh %20 : vector<8x128xf32>
    %cst_18 = arith.constant 5.000000e-01 : f32
    %22 = vector.broadcast %cst_18 : f32 to vector<8x128xf32>
    %23 = arith.mulf %22, %21 : vector<8x128xf32>
    %cst_19 = arith.constant 5.000000e-01 : f32
    %24 = vector.broadcast %cst_19 : f32 to vector<8x128xf32>
    %25 = arith.addf %23, %24 : vector<8x128xf32>
    %26 = vector.extract_strided_slice %17 {offsets = [0, 128], sizes = [8, 128], strides = [1, 1]} : vector<8x512xf32> to vector<8x128xf32>
    %cst_20 = arith.constant 5.000000e-01 : f32
    %27 = vector.broadcast %cst_20 : f32 to vector<8x128xf32>
    %28 = arith.mulf %27, %26 : vector<8x128xf32>
    %29 = math.tanh %28 : vector<8x128xf32>
    %cst_21 = arith.constant 5.000000e-01 : f32
    %30 = vector.broadcast %cst_21 : f32 to vector<8x128xf32>
    %31 = arith.mulf %30, %29 : vector<8x128xf32>
    %cst_22 = arith.constant 5.000000e-01 : f32
    %32 = vector.broadcast %cst_22 : f32 to vector<8x128xf32>
    %33 = arith.addf %31, %32 : vector<8x128xf32>
    %34 = vector.extract_strided_slice %17 {offsets = [0, 256], sizes = [8, 128], strides = [1, 1]} : vector<8x512xf32> to vector<8x128xf32>
    %35 = math.tanh %34 : vector<8x128xf32>
    %36 = vector.extract_strided_slice %17 {offsets = [0, 384], sizes = [8, 128], strides = [1, 1]} : vector<8x512xf32> to vector<8x128xf32>
    %cst_23 = arith.constant 5.000000e-01 : f32
    %37 = vector.broadcast %cst_23 : f32 to vector<8x128xf32>
    %38 = arith.mulf %37, %36 : vector<8x128xf32>
    %39 = math.tanh %38 : vector<8x128xf32>
    %cst_24 = arith.constant 5.000000e-01 : f32
    %40 = vector.broadcast %cst_24 : f32 to vector<8x128xf32>
    %41 = arith.mulf %40, %39 : vector<8x128xf32>
    %cst_25 = arith.constant 5.000000e-01 : f32
    %42 = vector.broadcast %cst_25 : f32 to vector<8x128xf32>
    %43 = arith.addf %41, %42 : vector<8x128xf32>
    %44 = arith.mulf %33, %10 : vector<8x128xf32>
    %45 = arith.mulf %25, %35 : vector<8x128xf32>
    %46 = arith.addf %44, %45 : vector<8x128xf32>
    %47 = math.tanh %46 : vector<8x128xf32>
    %48 = arith.mulf %43, %47 : vector<8x128xf32>
    %c1_i32 = arith.constant 1 : i32
    %c8_i32_26 = arith.constant 8 : i32
    %49 = arith.muli %c1_i32, %c8_i32_26 : i32
    %50 = tpu.assume_multiple %49, 8 : i32
    %51 = arith.index_cast %50 : i32 to index
    %c0_27 = arith.constant 0 : index
    %52 = vector.load %arg10[%51, %c0_27] : memref<64x512xf32, #tpu.memory_space<vmem>>, vector<8x512xf32>
    %53 = arith.truncf %48 : vector<8x128xf32> to vector<8x128xbf16>
    %cst_28 = arith.constant dense<0.000000e+00> : vector<8x512xf32>
    %54 = tpu.matmul %53, %8, %cst_28 {dimension_numbers = #tpu.dot_dimension_numbers<[1], [0], [0], [1], [0, 0, 1, 1], [], []>} : vector<8x128xbf16>, vector<128x512xbf16>, vector<8x512xf32> -> vector<8x512xf32>
    %55 = arith.addf %52, %54 : vector<8x512xf32>
    %56 = vector.extract_strided_slice %55 {offsets = [0, 0], sizes = [8, 128], strides = [1, 1]} : vector<8x512xf32> to vector<8x128xf32>
    %cst_29 = arith.constant 5.000000e-01 : f32
    %57 = vector.broadcast %cst_29 : f32 to vector<8x128xf32>
    %58 = arith.mulf %57, %56 : vector<8x128xf32>
    %59 = math.tanh %58 : vector<8x128xf32>
    %cst_30 = arith.constant 5.000000e-01 : f32
    %60 = vector.broadcast %cst_30 : f32 to vector<8x128xf32>
    %61 = arith.mulf %60, %59 : vector<8x128xf32>
    %cst_31 = arith.constant 5.000000e-01 : f32
    %62 = vector.broadcast %cst_31 : f32 to vector<8x128xf32>
    %63 = arith.addf %61, %62 : vector<8x128xf32>
    %64 = vector.extract_strided_slice %55 {offsets = [0, 128], sizes = [8, 128], strides = [1, 1]} : vector<8x512xf32> to vector<8x128xf32>
    %cst_32 = arith.constant 5.000000e-01 : f32
    %65 = vector.broadcast %cst_32 : f32 to vector<8x128xf32>
    %66 = arith.mulf %65, %64 : vector<8x128xf32>
    %67 = math.tanh %66 : vector<8x128xf32>
    %cst_33 = arith.constant 5.000000e-01 : f32
    %68 = vector.broadcast %cst_33 : f32 to vector<8x128xf32>
    %69 = arith.mulf %68, %67 : vector<8x128xf32>
    %cst_34 = arith.constant 5.000000e-01 : f32
    %70 = vector.broadcast %cst_34 : f32 to vector<8x128xf32>
    %71 = arith.addf %69, %70 : vector<8x128xf32>
    %72 = vector.extract_strided_slice %55 {offsets = [0, 256], sizes = [8, 128], strides = [1, 1]} : vector<8x512xf32> to vector<8x128xf32>
    %73 = math.tanh %72 : vector<8x128xf32>
    %74 = vector.extract_strided_slice %55 {offsets = [0, 384], sizes = [8, 128], strides = [1, 1]} : vector<8x512xf32> to vector<8x128xf32>
    %cst_35 = arith.constant 5.000000e-01 : f32
    %75 = vector.broadcast %cst_35 : f32 to vector<8x128xf32>
    %76 = arith.mulf %75, %74 : vector<8x128xf32>
    %77 = math.tanh %76 : vector<8x128xf32>
    %cst_36 = arith.constant 5.000000e-01 : f32
    %78 = vector.broadcast %cst_36 : f32 to vector<8x128xf32>
    %79 = arith.mulf %78, %77 : vector<8x128xf32>
    %cst_37 = arith.constant 5.000000e-01 : f32
    %80 = vector.broadcast %cst_37 : f32 to vector<8x128xf32>
    %81 = arith.addf %79, %80 : vector<8x128xf32>
    %82 = arith.mulf %71, %46 : vector<8x128xf32>
    %83 = arith.mulf %63, %73 : vector<8x128xf32>
    %84 = arith.addf %82, %83 : vector<8x128xf32>
    %85 = math.tanh %84 : vector<8x128xf32>
    %86 = arith.mulf %81, %85 : vector<8x128xf32>
    %c2_i32 = arith.constant 2 : i32
    %c8_i32_38 = arith.constant 8 : i32
    %87 = arith.muli %c2_i32, %c8_i32_38 : i32
    %88 = tpu.assume_multiple %87, 8 : i32
    %89 = arith.index_cast %88 : i32 to index
    %c0_39 = arith.constant 0 : index
    %90 = vector.load %arg10[%89, %c0_39] : memref<64x512xf32, #tpu.memory_space<vmem>>, vector<8x512xf32>
    %91 = arith.truncf %86 : vector<8x128xf32> to vector<8x128xbf16>
    %cst_40 = arith.constant dense<0.000000e+00> : vector<8x512xf32>
    %92 = tpu.matmul %91, %8, %cst_40 {dimension_numbers = #tpu.dot_dimension_numbers<[1], [0], [0], [1], [0, 0, 1, 1], [], []>} : vector<8x128xbf16>, vector<128x512xbf16>, vector<8x512xf32> -> vector<8x512xf32>
    %93 = arith.addf %90, %92 : vector<8x512xf32>
    %94 = vector.extract_strided_slice %93 {offsets = [0, 0], sizes = [8, 128], strides = [1, 1]} : vector<8x512xf32> to vector<8x128xf32>
    %cst_41 = arith.constant 5.000000e-01 : f32
    %95 = vector.broadcast %cst_41 : f32 to vector<8x128xf32>
    %96 = arith.mulf %95, %94 : vector<8x128xf32>
    %97 = math.tanh %96 : vector<8x128xf32>
    %cst_42 = arith.constant 5.000000e-01 : f32
    %98 = vector.broadcast %cst_42 : f32 to vector<8x128xf32>
    %99 = arith.mulf %98, %97 : vector<8x128xf32>
    %cst_43 = arith.constant 5.000000e-01 : f32
    %100 = vector.broadcast %cst_43 : f32 to vector<8x128xf32>
    %101 = arith.addf %99, %100 : vector<8x128xf32>
    %102 = vector.extract_strided_slice %93 {offsets = [0, 128], sizes = [8, 128], strides = [1, 1]} : vector<8x512xf32> to vector<8x128xf32>
    %cst_44 = arith.constant 5.000000e-01 : f32
    %103 = vector.broadcast %cst_44 : f32 to vector<8x128xf32>
    %104 = arith.mulf %103, %102 : vector<8x128xf32>
    %105 = math.tanh %104 : vector<8x128xf32>
    %cst_45 = arith.constant 5.000000e-01 : f32
    %106 = vector.broadcast %cst_45 : f32 to vector<8x128xf32>
    %107 = arith.mulf %106, %105 : vector<8x128xf32>
    %cst_46 = arith.constant 5.000000e-01 : f32
    %108 = vector.broadcast %cst_46 : f32 to vector<8x128xf32>
    %109 = arith.addf %107, %108 : vector<8x128xf32>
    %110 = vector.extract_strided_slice %93 {offsets = [0, 256], sizes = [8, 128], strides = [1, 1]} : vector<8x512xf32> to vector<8x128xf32>
    %111 = math.tanh %110 : vector<8x128xf32>
    %112 = vector.extract_strided_slice %93 {offsets = [0, 384], sizes = [8, 128], strides = [1, 1]} : vector<8x512xf32> to vector<8x128xf32>
    %cst_47 = arith.constant 5.000000e-01 : f32
    %113 = vector.broadcast %cst_47 : f32 to vector<8x128xf32>
    %114 = arith.mulf %113, %112 : vector<8x128xf32>
    %115 = math.tanh %114 : vector<8x128xf32>
    %cst_48 = arith.constant 5.000000e-01 : f32
    %116 = vector.broadcast %cst_48 : f32 to vector<8x128xf32>
    %117 = arith.mulf %116, %115 : vector<8x128xf32>
    %cst_49 = arith.constant 5.000000e-01 : f32
    %118 = vector.broadcast %cst_49 : f32 to vector<8x128xf32>
    %119 = arith.addf %117, %118 : vector<8x128xf32>
    %120 = arith.mulf %109, %84 : vector<8x128xf32>
    %121 = arith.mulf %101, %111 : vector<8x128xf32>
    %122 = arith.addf %120, %121 : vector<8x128xf32>
    %123 = math.tanh %122 : vector<8x128xf32>
    %124 = arith.mulf %119, %123 : vector<8x128xf32>
    %c3_i32 = arith.constant 3 : i32
    %c8_i32_50 = arith.constant 8 : i32
    %125 = arith.muli %c3_i32, %c8_i32_50 : i32
    %126 = tpu.assume_multiple %125, 8 : i32
    %127 = arith.index_cast %126 : i32 to index
    %c0_51 = arith.constant 0 : index
    %128 = vector.load %arg10[%127, %c0_51] : memref<64x512xf32, #tpu.memory_space<vmem>>, vector<8x512xf32>
    %129 = arith.truncf %124 : vector<8x128xf32> to vector<8x128xbf16>
    %cst_52 = arith.constant dense<0.000000e+00> : vector<8x512xf32>
    %130 = tpu.matmul %129, %8, %cst_52 {dimension_numbers = #tpu.dot_dimension_numbers<[1], [0], [0], [1], [0, 0, 1, 1], [], []>} : vector<8x128xbf16>, vector<128x512xbf16>, vector<8x512xf32> -> vector<8x512xf32>
    %131 = arith.addf %128, %130 : vector<8x512xf32>
    %132 = vector.extract_strided_slice %131 {offsets = [0, 0], sizes = [8, 128], strides = [1, 1]} : vector<8x512xf32> to vector<8x128xf32>
    %cst_53 = arith.constant 5.000000e-01 : f32
    %133 = vector.broadcast %cst_53 : f32 to vector<8x128xf32>
    %134 = arith.mulf %133, %132 : vector<8x128xf32>
    %135 = math.tanh %134 : vector<8x128xf32>
    %cst_54 = arith.constant 5.000000e-01 : f32
    %136 = vector.broadcast %cst_54 : f32 to vector<8x128xf32>
    %137 = arith.mulf %136, %135 : vector<8x128xf32>
    %cst_55 = arith.constant 5.000000e-01 : f32
    %138 = vector.broadcast %cst_55 : f32 to vector<8x128xf32>
    %139 = arith.addf %137, %138 : vector<8x128xf32>
    %140 = vector.extract_strided_slice %131 {offsets = [0, 128], sizes = [8, 128], strides = [1, 1]} : vector<8x512xf32> to vector<8x128xf32>
    %cst_56 = arith.constant 5.000000e-01 : f32
    %141 = vector.broadcast %cst_56 : f32 to vector<8x128xf32>
    %142 = arith.mulf %141, %140 : vector<8x128xf32>
    %143 = math.tanh %142 : vector<8x128xf32>
    %cst_57 = arith.constant 5.000000e-01 : f32
    %144 = vector.broadcast %cst_57 : f32 to vector<8x128xf32>
    %145 = arith.mulf %144, %143 : vector<8x128xf32>
    %cst_58 = arith.constant 5.000000e-01 : f32
    %146 = vector.broadcast %cst_58 : f32 to vector<8x128xf32>
    %147 = arith.addf %145, %146 : vector<8x128xf32>
    %148 = vector.extract_strided_slice %131 {offsets = [0, 256], sizes = [8, 128], strides = [1, 1]} : vector<8x512xf32> to vector<8x128xf32>
    %149 = math.tanh %148 : vector<8x128xf32>
    %150 = vector.extract_strided_slice %131 {offsets = [0, 384], sizes = [8, 128], strides = [1, 1]} : vector<8x512xf32> to vector<8x128xf32>
    %cst_59 = arith.constant 5.000000e-01 : f32
    %151 = vector.broadcast %cst_59 : f32 to vector<8x128xf32>
    %152 = arith.mulf %151, %150 : vector<8x128xf32>
    %153 = math.tanh %152 : vector<8x128xf32>
    %cst_60 = arith.constant 5.000000e-01 : f32
    %154 = vector.broadcast %cst_60 : f32 to vector<8x128xf32>
    %155 = arith.mulf %154, %153 : vector<8x128xf32>
    %cst_61 = arith.constant 5.000000e-01 : f32
    %156 = vector.broadcast %cst_61 : f32 to vector<8x128xf32>
    %157 = arith.addf %155, %156 : vector<8x128xf32>
    %158 = arith.mulf %147, %122 : vector<8x128xf32>
    %159 = arith.mulf %139, %149 : vector<8x128xf32>
    %160 = arith.addf %158, %159 : vector<8x128xf32>
    %161 = math.tanh %160 : vector<8x128xf32>
    %162 = arith.mulf %157, %161 : vector<8x128xf32>
    %c4_i32 = arith.constant 4 : i32
    %c8_i32_62 = arith.constant 8 : i32
    %163 = arith.muli %c4_i32, %c8_i32_62 : i32
    %164 = tpu.assume_multiple %163, 8 : i32
    %165 = arith.index_cast %164 : i32 to index
    %c0_63 = arith.constant 0 : index
    %166 = vector.load %arg10[%165, %c0_63] : memref<64x512xf32, #tpu.memory_space<vmem>>, vector<8x512xf32>
    %167 = arith.truncf %162 : vector<8x128xf32> to vector<8x128xbf16>
    %cst_64 = arith.constant dense<0.000000e+00> : vector<8x512xf32>
    %168 = tpu.matmul %167, %8, %cst_64 {dimension_numbers = #tpu.dot_dimension_numbers<[1], [0], [0], [1], [0, 0, 1, 1], [], []>} : vector<8x128xbf16>, vector<128x512xbf16>, vector<8x512xf32> -> vector<8x512xf32>
    %169 = arith.addf %166, %168 : vector<8x512xf32>
    %170 = vector.extract_strided_slice %169 {offsets = [0, 0], sizes = [8, 128], strides = [1, 1]} : vector<8x512xf32> to vector<8x128xf32>
    %cst_65 = arith.constant 5.000000e-01 : f32
    %171 = vector.broadcast %cst_65 : f32 to vector<8x128xf32>
    %172 = arith.mulf %171, %170 : vector<8x128xf32>
    %173 = math.tanh %172 : vector<8x128xf32>
    %cst_66 = arith.constant 5.000000e-01 : f32
    %174 = vector.broadcast %cst_66 : f32 to vector<8x128xf32>
    %175 = arith.mulf %174, %173 : vector<8x128xf32>
    %cst_67 = arith.constant 5.000000e-01 : f32
    %176 = vector.broadcast %cst_67 : f32 to vector<8x128xf32>
    %177 = arith.addf %175, %176 : vector<8x128xf32>
    %178 = vector.extract_strided_slice %169 {offsets = [0, 128], sizes = [8, 128], strides = [1, 1]} : vector<8x512xf32> to vector<8x128xf32>
    %cst_68 = arith.constant 5.000000e-01 : f32
    %179 = vector.broadcast %cst_68 : f32 to vector<8x128xf32>
    %180 = arith.mulf %179, %178 : vector<8x128xf32>
    %181 = math.tanh %180 : vector<8x128xf32>
    %cst_69 = arith.constant 5.000000e-01 : f32
    %182 = vector.broadcast %cst_69 : f32 to vector<8x128xf32>
    %183 = arith.mulf %182, %181 : vector<8x128xf32>
    %cst_70 = arith.constant 5.000000e-01 : f32
    %184 = vector.broadcast %cst_70 : f32 to vector<8x128xf32>
    %185 = arith.addf %183, %184 : vector<8x128xf32>
    %186 = vector.extract_strided_slice %169 {offsets = [0, 256], sizes = [8, 128], strides = [1, 1]} : vector<8x512xf32> to vector<8x128xf32>
    %187 = math.tanh %186 : vector<8x128xf32>
    %188 = vector.extract_strided_slice %169 {offsets = [0, 384], sizes = [8, 128], strides = [1, 1]} : vector<8x512xf32> to vector<8x128xf32>
    %cst_71 = arith.constant 5.000000e-01 : f32
    %189 = vector.broadcast %cst_71 : f32 to vector<8x128xf32>
    %190 = arith.mulf %189, %188 : vector<8x128xf32>
    %191 = math.tanh %190 : vector<8x128xf32>
    %cst_72 = arith.constant 5.000000e-01 : f32
    %192 = vector.broadcast %cst_72 : f32 to vector<8x128xf32>
    %193 = arith.mulf %192, %191 : vector<8x128xf32>
    %cst_73 = arith.constant 5.000000e-01 : f32
    %194 = vector.broadcast %cst_73 : f32 to vector<8x128xf32>
    %195 = arith.addf %193, %194 : vector<8x128xf32>
    %196 = arith.mulf %185, %160 : vector<8x128xf32>
    %197 = arith.mulf %177, %187 : vector<8x128xf32>
    %198 = arith.addf %196, %197 : vector<8x128xf32>
    %199 = math.tanh %198 : vector<8x128xf32>
    %200 = arith.mulf %195, %199 : vector<8x128xf32>
    %c5_i32 = arith.constant 5 : i32
    %c8_i32_74 = arith.constant 8 : i32
    %201 = arith.muli %c5_i32, %c8_i32_74 : i32
    %202 = tpu.assume_multiple %201, 8 : i32
    %203 = arith.index_cast %202 : i32 to index
    %c0_75 = arith.constant 0 : index
    %204 = vector.load %arg10[%203, %c0_75] : memref<64x512xf32, #tpu.memory_space<vmem>>, vector<8x512xf32>
    %205 = arith.truncf %200 : vector<8x128xf32> to vector<8x128xbf16>
    %cst_76 = arith.constant dense<0.000000e+00> : vector<8x512xf32>
    %206 = tpu.matmul %205, %8, %cst_76 {dimension_numbers = #tpu.dot_dimension_numbers<[1], [0], [0], [1], [0, 0, 1, 1], [], []>} : vector<8x128xbf16>, vector<128x512xbf16>, vector<8x512xf32> -> vector<8x512xf32>
    %207 = arith.addf %204, %206 : vector<8x512xf32>
    %208 = vector.extract_strided_slice %207 {offsets = [0, 0], sizes = [8, 128], strides = [1, 1]} : vector<8x512xf32> to vector<8x128xf32>
    %cst_77 = arith.constant 5.000000e-01 : f32
    %209 = vector.broadcast %cst_77 : f32 to vector<8x128xf32>
    %210 = arith.mulf %209, %208 : vector<8x128xf32>
    %211 = math.tanh %210 : vector<8x128xf32>
    %cst_78 = arith.constant 5.000000e-01 : f32
    %212 = vector.broadcast %cst_78 : f32 to vector<8x128xf32>
    %213 = arith.mulf %212, %211 : vector<8x128xf32>
    %cst_79 = arith.constant 5.000000e-01 : f32
    %214 = vector.broadcast %cst_79 : f32 to vector<8x128xf32>
    %215 = arith.addf %213, %214 : vector<8x128xf32>
    %216 = vector.extract_strided_slice %207 {offsets = [0, 128], sizes = [8, 128], strides = [1, 1]} : vector<8x512xf32> to vector<8x128xf32>
    %cst_80 = arith.constant 5.000000e-01 : f32
    %217 = vector.broadcast %cst_80 : f32 to vector<8x128xf32>
    %218 = arith.mulf %217, %216 : vector<8x128xf32>
    %219 = math.tanh %218 : vector<8x128xf32>
    %cst_81 = arith.constant 5.000000e-01 : f32
    %220 = vector.broadcast %cst_81 : f32 to vector<8x128xf32>
    %221 = arith.mulf %220, %219 : vector<8x128xf32>
    %cst_82 = arith.constant 5.000000e-01 : f32
    %222 = vector.broadcast %cst_82 : f32 to vector<8x128xf32>
    %223 = arith.addf %221, %222 : vector<8x128xf32>
    %224 = vector.extract_strided_slice %207 {offsets = [0, 256], sizes = [8, 128], strides = [1, 1]} : vector<8x512xf32> to vector<8x128xf32>
    %225 = math.tanh %224 : vector<8x128xf32>
    %226 = vector.extract_strided_slice %207 {offsets = [0, 384], sizes = [8, 128], strides = [1, 1]} : vector<8x512xf32> to vector<8x128xf32>
    %cst_83 = arith.constant 5.000000e-01 : f32
    %227 = vector.broadcast %cst_83 : f32 to vector<8x128xf32>
    %228 = arith.mulf %227, %226 : vector<8x128xf32>
    %229 = math.tanh %228 : vector<8x128xf32>
    %cst_84 = arith.constant 5.000000e-01 : f32
    %230 = vector.broadcast %cst_84 : f32 to vector<8x128xf32>
    %231 = arith.mulf %230, %229 : vector<8x128xf32>
    %cst_85 = arith.constant 5.000000e-01 : f32
    %232 = vector.broadcast %cst_85 : f32 to vector<8x128xf32>
    %233 = arith.addf %231, %232 : vector<8x128xf32>
    %234 = arith.mulf %223, %198 : vector<8x128xf32>
    %235 = arith.mulf %215, %225 : vector<8x128xf32>
    %236 = arith.addf %234, %235 : vector<8x128xf32>
    %237 = math.tanh %236 : vector<8x128xf32>
    %238 = arith.mulf %233, %237 : vector<8x128xf32>
    %c6_i32 = arith.constant 6 : i32
    %c8_i32_86 = arith.constant 8 : i32
    %239 = arith.muli %c6_i32, %c8_i32_86 : i32
    %240 = tpu.assume_multiple %239, 8 : i32
    %241 = arith.index_cast %240 : i32 to index
    %c0_87 = arith.constant 0 : index
    %242 = vector.load %arg10[%241, %c0_87] : memref<64x512xf32, #tpu.memory_space<vmem>>, vector<8x512xf32>
    %243 = arith.truncf %238 : vector<8x128xf32> to vector<8x128xbf16>
    %cst_88 = arith.constant dense<0.000000e+00> : vector<8x512xf32>
    %244 = tpu.matmul %243, %8, %cst_88 {dimension_numbers = #tpu.dot_dimension_numbers<[1], [0], [0], [1], [0, 0, 1, 1], [], []>} : vector<8x128xbf16>, vector<128x512xbf16>, vector<8x512xf32> -> vector<8x512xf32>
    %245 = arith.addf %242, %244 : vector<8x512xf32>
    %246 = vector.extract_strided_slice %245 {offsets = [0, 0], sizes = [8, 128], strides = [1, 1]} : vector<8x512xf32> to vector<8x128xf32>
    %cst_89 = arith.constant 5.000000e-01 : f32
    %247 = vector.broadcast %cst_89 : f32 to vector<8x128xf32>
    %248 = arith.mulf %247, %246 : vector<8x128xf32>
    %249 = math.tanh %248 : vector<8x128xf32>
    %cst_90 = arith.constant 5.000000e-01 : f32
    %250 = vector.broadcast %cst_90 : f32 to vector<8x128xf32>
    %251 = arith.mulf %250, %249 : vector<8x128xf32>
    %cst_91 = arith.constant 5.000000e-01 : f32
    %252 = vector.broadcast %cst_91 : f32 to vector<8x128xf32>
    %253 = arith.addf %251, %252 : vector<8x128xf32>
    %254 = vector.extract_strided_slice %245 {offsets = [0, 128], sizes = [8, 128], strides = [1, 1]} : vector<8x512xf32> to vector<8x128xf32>
    %cst_92 = arith.constant 5.000000e-01 : f32
    %255 = vector.broadcast %cst_92 : f32 to vector<8x128xf32>
    %256 = arith.mulf %255, %254 : vector<8x128xf32>
    %257 = math.tanh %256 : vector<8x128xf32>
    %cst_93 = arith.constant 5.000000e-01 : f32
    %258 = vector.broadcast %cst_93 : f32 to vector<8x128xf32>
    %259 = arith.mulf %258, %257 : vector<8x128xf32>
    %cst_94 = arith.constant 5.000000e-01 : f32
    %260 = vector.broadcast %cst_94 : f32 to vector<8x128xf32>
    %261 = arith.addf %259, %260 : vector<8x128xf32>
    %262 = vector.extract_strided_slice %245 {offsets = [0, 256], sizes = [8, 128], strides = [1, 1]} : vector<8x512xf32> to vector<8x128xf32>
    %263 = math.tanh %262 : vector<8x128xf32>
    %264 = vector.extract_strided_slice %245 {offsets = [0, 384], sizes = [8, 128], strides = [1, 1]} : vector<8x512xf32> to vector<8x128xf32>
    %cst_95 = arith.constant 5.000000e-01 : f32
    %265 = vector.broadcast %cst_95 : f32 to vector<8x128xf32>
    %266 = arith.mulf %265, %264 : vector<8x128xf32>
    %267 = math.tanh %266 : vector<8x128xf32>
    %cst_96 = arith.constant 5.000000e-01 : f32
    %268 = vector.broadcast %cst_96 : f32 to vector<8x128xf32>
    %269 = arith.mulf %268, %267 : vector<8x128xf32>
    %cst_97 = arith.constant 5.000000e-01 : f32
    %270 = vector.broadcast %cst_97 : f32 to vector<8x128xf32>
    %271 = arith.addf %269, %270 : vector<8x128xf32>
    %272 = arith.mulf %261, %236 : vector<8x128xf32>
    %273 = arith.mulf %253, %263 : vector<8x128xf32>
    %274 = arith.addf %272, %273 : vector<8x128xf32>
    %275 = math.tanh %274 : vector<8x128xf32>
    %276 = arith.mulf %271, %275 : vector<8x128xf32>
    %c7_i32 = arith.constant 7 : i32
    %c8_i32_98 = arith.constant 8 : i32
    %277 = arith.muli %c7_i32, %c8_i32_98 : i32
    %278 = tpu.assume_multiple %277, 8 : i32
    %279 = arith.index_cast %278 : i32 to index
    %c0_99 = arith.constant 0 : index
    %280 = vector.load %arg10[%279, %c0_99] : memref<64x512xf32, #tpu.memory_space<vmem>>, vector<8x512xf32>
    %281 = arith.truncf %276 : vector<8x128xf32> to vector<8x128xbf16>
    %cst_100 = arith.constant dense<0.000000e+00> : vector<8x512xf32>
    %282 = tpu.matmul %281, %8, %cst_100 {dimension_numbers = #tpu.dot_dimension_numbers<[1], [0], [0], [1], [0, 0, 1, 1], [], []>} : vector<8x128xbf16>, vector<128x512xbf16>, vector<8x512xf32> -> vector<8x512xf32>
    %283 = arith.addf %280, %282 : vector<8x512xf32>
    %284 = vector.extract_strided_slice %283 {offsets = [0, 0], sizes = [8, 128], strides = [1, 1]} : vector<8x512xf32> to vector<8x128xf32>
    %cst_101 = arith.constant 5.000000e-01 : f32
    %285 = vector.broadcast %cst_101 : f32 to vector<8x128xf32>
    %286 = arith.mulf %285, %284 : vector<8x128xf32>
    %287 = math.tanh %286 : vector<8x128xf32>
    %cst_102 = arith.constant 5.000000e-01 : f32
    %288 = vector.broadcast %cst_102 : f32 to vector<8x128xf32>
    %289 = arith.mulf %288, %287 : vector<8x128xf32>
    %cst_103 = arith.constant 5.000000e-01 : f32
    %290 = vector.broadcast %cst_103 : f32 to vector<8x128xf32>
    %291 = arith.addf %289, %290 : vector<8x128xf32>
    %292 = vector.extract_strided_slice %283 {offsets = [0, 128], sizes = [8, 128], strides = [1, 1]} : vector<8x512xf32> to vector<8x128xf32>
    %cst_104 = arith.constant 5.000000e-01 : f32
    %293 = vector.broadcast %cst_104 : f32 to vector<8x128xf32>
    %294 = arith.mulf %293, %292 : vector<8x128xf32>
    %295 = math.tanh %294 : vector<8x128xf32>
    %cst_105 = arith.constant 5.000000e-01 : f32
    %296 = vector.broadcast %cst_105 : f32 to vector<8x128xf32>
    %297 = arith.mulf %296, %295 : vector<8x128xf32>
    %cst_106 = arith.constant 5.000000e-01 : f32
    %298 = vector.broadcast %cst_106 : f32 to vector<8x128xf32>
    %299 = arith.addf %297, %298 : vector<8x128xf32>
    %300 = vector.extract_strided_slice %283 {offsets = [0, 256], sizes = [8, 128], strides = [1, 1]} : vector<8x512xf32> to vector<8x128xf32>
    %301 = math.tanh %300 : vector<8x128xf32>
    %302 = vector.extract_strided_slice %283 {offsets = [0, 384], sizes = [8, 128], strides = [1, 1]} : vector<8x512xf32> to vector<8x128xf32>
    %cst_107 = arith.constant 5.000000e-01 : f32
    %303 = vector.broadcast %cst_107 : f32 to vector<8x128xf32>
    %304 = arith.mulf %303, %302 : vector<8x128xf32>
    %305 = math.tanh %304 : vector<8x128xf32>
    %cst_108 = arith.constant 5.000000e-01 : f32
    %306 = vector.broadcast %cst_108 : f32 to vector<8x128xf32>
    %307 = arith.mulf %306, %305 : vector<8x128xf32>
    %cst_109 = arith.constant 5.000000e-01 : f32
    %308 = vector.broadcast %cst_109 : f32 to vector<8x128xf32>
    %309 = arith.addf %307, %308 : vector<8x128xf32>
    %310 = arith.mulf %299, %274 : vector<8x128xf32>
    %311 = arith.mulf %291, %301 : vector<8x128xf32>
    %312 = arith.addf %310, %311 : vector<8x128xf32>
    %313 = math.tanh %312 : vector<8x128xf32>
    %314 = arith.mulf %309, %313 : vector<8x128xf32>
    %c8_i32_110 = arith.constant 8 : i32
    %c0_111 = arith.constant 0 : index
    %c0_112 = arith.constant 0 : index
    %315 = vector.load %arg8[%c0_111, %c0_112] : memref<8x128xf32, #tpu.memory_space<vmem>>, vector<8x128xf32>
    tpu.vector_store %arg8[%c0_111, %c0_112], %314 {strides = array<i32>} : memref<8x128xf32, #tpu.memory_space<vmem>>, vector<8x128xf32>,
    %c0_113 = arith.constant 0 : index
    %c0_114 = arith.constant 0 : index
    %316 = vector.load %arg9[%c0_113, %c0_114] : memref<8x128xf32, #tpu.memory_space<vmem>>, vector<8x128xf32>
    tpu.vector_store %arg9[%c0_113, %c0_114], %312 {strides = array<i32>} : memref<8x128xf32, #tpu.memory_space<vmem>>, vector<8x128xf32>,
    %c0_i32_115 = arith.constant 0 : i32
    %317 = arith.cmpi eq, %arg1, %c0_i32_115 : i32
    %318 = arith.extui %317 : i1 to i32
    %c0_i32_116 = arith.constant 0 : i32
    %319 = arith.cmpi ne, %318, %c0_i32_116 : i32
    scf.if %319 {
      %c0_117 = arith.constant 0 : index
      %c0_118 = arith.constant 0 : index
      %320 = vector.load %arg8[%c0_117, %c0_118] : memref<8x128xf32, #tpu.memory_space<vmem>>, vector<8x128xf32>
      %c0_119 = arith.constant 0 : index
      %c0_120 = arith.constant 0 : index
      %321 = vector.load %arg5[%c0_119, %c0_120] : memref<128x1xf32, #tpu.memory_space<vmem>>, vector<128x1xf32>
      %cst_121 = arith.constant dense<0.000000e+00> : vector<8x1xf32>
      %322 = tpu.matmul %320, %321, %cst_121 {dimension_numbers = #tpu.dot_dimension_numbers<[1], [0], [0], [1], [0, 0, 1, 1], [], []>} : vector<8x128xf32>, vector<128x1xf32>, vector<8x1xf32> -> vector<8x1xf32>
      %c0_122 = arith.constant 0 : index
      %c0_123 = arith.constant 0 : index
      %323 = vector.load %arg6[%c0_122, %c0_123] : memref<1x1xf32, #tpu.memory_space<vmem>>, vector<1x1xf32>
      %324 = vector.broadcast %323 : vector<1x1xf32> to vector<8x1xf32>
      %325 = arith.addf %322, %324 : vector<8x1xf32>
      %cst_124 = arith.constant 5.000000e-01 : f32
      %326 = vector.broadcast %cst_124 : f32 to vector<8x1xf32>
      %327 = arith.mulf %326, %325 : vector<8x1xf32>
      %328 = math.tanh %327 : vector<8x1xf32>
      %cst_125 = arith.constant 5.000000e-01 : f32
      %329 = vector.broadcast %cst_125 : f32 to vector<8x1xf32>
      %330 = arith.mulf %329, %328 : vector<8x1xf32>
      %cst_126 = arith.constant 5.000000e-01 : f32
      %331 = vector.broadcast %cst_126 : f32 to vector<8x1xf32>
      %332 = arith.addf %330, %331 : vector<8x1xf32>
      %c0_127 = arith.constant 0 : index
      %c0_128 = arith.constant 0 : index
      %333 = vector.load %arg7[%c0_127, %c0_128] : memref<8x1xf32, #tpu.memory_space<vmem>>, vector<8x1xf32>
      tpu.vector_store %arg7[%c0_127, %c0_128], %332 {strides = array<i32>} : memref<8x1xf32, #tpu.memory_space<vmem>>, vector<8x1xf32>,
    } else {
    }
    return
  }
  func.func @transform_0(%arg0: i32, %arg1: i32) -> (i32, i32, i32, i32) {
    %c0_i32 = arith.constant 0 : i32
    %c0_i32_0 = arith.constant 0 : i32
    %c0_i32_1 = arith.constant 0 : i32
    return %arg0, %arg1, %c0_i32, %c0_i32_0 : i32, i32, i32, i32
  }
  func.func @transform_1(%arg0: i32, %arg1: i32) -> (i32, i32) {
    %c0_i32 = arith.constant 0 : i32
    %c0_i32_0 = arith.constant 0 : i32
    %c0_i32_1 = arith.constant 0 : i32
    return %c0_i32, %c0_i32_0 : i32, i32
  }
  func.func @transform_2(%arg0: i32, %arg1: i32) -> (i32, i32) {
    %c0_i32 = arith.constant 0 : i32
    %c0_i32_0 = arith.constant 0 : i32
    %c0_i32_1 = arith.constant 0 : i32
    return %c0_i32, %c0_i32_0 : i32, i32
  }
  func.func @transform_3(%arg0: i32, %arg1: i32) -> (i32, i32) {
    %c0_i32 = arith.constant 0 : i32
    %c0_i32_0 = arith.constant 0 : i32
    %c0_i32_1 = arith.constant 0 : i32
    return %c0_i32, %c0_i32_0 : i32, i32
  }
  func.func @transform_4(%arg0: i32, %arg1: i32) -> (i32, i32) {
    %c0_i32 = arith.constant 0 : i32
    %c0_i32_0 = arith.constant 0 : i32
    %c0_i32_1 = arith.constant 0 : i32
    return %c0_i32, %c0_i32_0 : i32, i32
  }
  func.func @transform_5(%arg0: i32, %arg1: i32) -> (i32, i32) {
    %c0_i32 = arith.constant 0 : i32
    %c0_i32_0 = arith.constant 0 : i32
    return %arg0, %c0_i32 : i32, i32
  }
}

</mosaic_0001>

<llo_original>
// kernel: dna_discriminator.1
$region0: #{dna_discriminator.1}
  #allocation0 [shape = 'u32[]', space=smem, size = 0x4, offset = 0x4, fixed_abs, tag = 'smem constant byte address 0x4 - core index']
  #allocation1 [shape = 'u32[72,128]{1,0:T(1,128)}', space=vmem, size = 0x9000, scoped, tag = 'internal scratch']
  #allocation2 [shape = 'f32[8,128]{1,0:T(8,128)}', space=vmem, size = 0x1000, scoped, tag = 'scratch operand']
  #allocation3 [shape = 'f32[8,128]{1,0:T(8,128)}', space=vmem, size = 0x1000, scoped, tag = 'scratch operand']
  #allocation4 [shape = 'f32[64,512]{1,0:T(8,128)}', space=vmem, size = 0x20000, scoped, tag = 'scratch operand']
  #allocation5 [shape = 'f32[1,1]{1,0:T(1,128)S(1)}', space=vmem, size = 0x200, scoped, tag = 'scoped memory for dna_discriminator.1']
  %s0 = inlined_call_operand.vmem [shape: bf16[1,1,64,5], index: 0, kind: input, shape index: {}]
  %s1 = inlined_call_operand.vmem [shape: bf16[5,512], index: 1, kind: input, shape index: {}]
  %s2 = inlined_call_operand.vmem [shape: bf16[128,512], index: 2, kind: input, shape index: {}]
  %s3 = inlined_call_operand.vmem [shape: f32[128,1], index: 3, kind: input, shape index: {}]
  %s4 = inlined_call_operand.<no memory space> [shape: f32[1,1], index: 4, kind: input, shape index: {}]
  %s5 = inlined_call_operand.vmem [shape: f32[8,1], index: 5, kind: output, shape index: {}]
  %s6 = sld [smem:[#allocation0]]
  $region38: #{dna_discriminator.1} parent=0
    _
  %s8 = ssub.s32 1, %s6
  %s9 = scalar_select 0, %s8, %s6
  %v10 = vstv %s4
  %11 = vst [vmem:[#allocation5] sm:$0x1] %v10
  // Predicated region
  $region2: #{dna_discriminator.1} parent=0 // pred_check
    _
  $region3: #{dna_discriminator.1} parent=0 // pred_check_branch
    %13 = sbr.rel (0) target = $region5
  $region4: #{dna_discriminator.1} parent=0 // pred_region
    _
  $region5: #{dna_discriminator.1} parent=0 // pred_fallthru
    _
  // Predicated region
  $region6: #{dna_discriminator.1} parent=0 // pred_check
    _
  $region7: #{dna_discriminator.1} parent=0 // pred_check_branch
    %15 = sbr.rel (0) target = $region9
  $region8: #{dna_discriminator.1} parent=0 // pred_region
    _
  $region9: #{dna_discriminator.1} parent=0 // pred_fallthru
    _
  // Predicated region
  $region10: #{dna_discriminator.1} parent=0 // pred_check
    _
  $region11: #{dna_discriminator.1} parent=0 // pred_check_branch
    %17 = sbr.rel (0) target = $region13
  $region12: #{dna_discriminator.1} parent=0 // pred_region
    _
  $region13: #{dna_discriminator.1} parent=0 // pred_fallthru
    _
  // Predicated region
  $region14: #{dna_discriminator.1} parent=0 // pred_check
    _
  $region15: #{dna_discriminator.1} parent=0 // pred_check_branch
    %19 = sbr.rel (0) target = $region17
  $region16: #{dna_discriminator.1} parent=0 // pred_region
    _
  $region17: #{dna_discriminator.1} parent=0 // pred_fallthru
    _
  // Predicated region
  $region18: #{dna_discriminator.1} parent=0 // pred_check
    _
  $region19: #{dna_discriminator.1} parent=0 // pred_check_branch
    %21 = sbr.rel (0) target = $region21
  $region20: #{dna_discriminator.1} parent=0 // pred_region
    _
  $region21: #{dna_discriminator.1} parent=0 // pred_fallthru
    _
  %p23 = scmp.eq.s32.totalorder 0, 0
  // Predicated region
  $region22: #{dna_discriminator.1} parent=0 // pred_check
    %p24 = pneg %p23
  $region23: #{dna_discriminator.1} parent=0 // pred_check_branch
    %26 = sbr.rel (%p24) target = $region25
  $region24: #{dna_discriminator.1} parent=0 // pred_region
    %27 = vst [vmem:[#allocation2] sm:$0xff] 0.0
    %28 = vst [vmem:[#allocation3] sm:$0xff] 0.0
  $region25: #{dna_discriminator.1} parent=0 // pred_fallthru
    _
  %v29 = vld [vmem:[%s0] sm:$0xf]
  %v30 = vld [vmem:[%s0 + $0x4] sm:$0xf]
  %v31 = vld [vmem:[%s0 + $0x8] sm:$0xf]
  %v32 = vld [vmem:[%s0 + $0xc] sm:$0xf]
  %v33 = vld [vmem:[%s0 + $0x10] sm:$0xf]
  %v34 = vld [vmem:[%s0 + $0x14] sm:$0xf]
  %v35 = vld [vmem:[%s0 + $0x18] sm:$0xf]
  %v36 = vld [vmem:[%s0 + $0x1c] sm:$0xf]
  %v37 = vld [vmem:[%s1] sm:$0x77]
  %v38 = vld [vmem:[%s1 + $0x8] sm:$0x77]
  %v47 = vunpack.c.l.b16 %v29
  %v48 = vunpack.c.l.b16 %v30
  %v49 = vunpack.c.l.b16 %v31
  %v50 = vunpack.c.l.b16 %v32
  %v51 = vunpack.c.l.b16 %v33
  %v52 = vunpack.c.l.b16 %v34
  %v53 = vunpack.c.l.b16 %v35
  %v54 = vunpack.c.l.b16 %v36
  %v55 = vpack.c.b16 %v48, %v47
  %v56 = vpack.c.b16 %v50, %v49
  %v57 = vpack.c.b16 %v52, %v51
  %v58 = vpack.c.b16 %v54, %v53
  %v61 = vunpack.c.l.b16 %v37
  %v62 = vunpack.c.h.b16 %v37
  %v63 = vunpack.c.l.b16 %v38
  %v64 = vunpack.c.h.b16 %v38
  %v65 = vpack.c.b16 %v61, %v61
  %v66 = vpack.c.b16 %v62, %v62
  %v67 = vpack.c.b16 %v63, %v63
  %v68 = vpack.c.b16 %v64, %v64
  %vm69 = vcmask 39936
  %v71 = vsel %vm69, %v55, 0
  %v74 = vsel %vm69, %v56, 0
  %v77 = vsel %vm69, %v57, 0
  %v80 = vsel %vm69, %v58, 0
  %vm82 = vcmask 1041408
  %vm83 = vcmask 1042432
  %v84 = vsel %vm82, 4294967295, 65535
  %v85 = vsel %vm83, %v84, 0
  %v87 = vand.u32 %v65, %v85
  %v90 = vand.u32 %v66, %v85
  %v93 = vand.u32 %v67, %v85
  %v96 = vand.u32 %v68, %v85
  %98 = vmatpush.bf16.msra.mxu0 0
  %99 = vmatpush.bf16.msra.mxu0 0
  %100 = vmatpush.bf16.msra.mxu0 0
  %101 = vmatpush.bf16.msra.mxu0 0
  %102 = vmatpush.bf16.msra.mxu0 0
  %103 = vmatpush.bf16.msra.mxu0 0
  %104 = vmatpush.bf16.msra.mxu0 0
  %105 = vmatpush.bf16.msra.mxu0 %v87
  %106 = vmatmul.bf16.gmra.mxu0 %v71
  %v107 = vpop.f32.mrf.mxu0
  %v108 = vadd.f32 0.0, %v107
  %v109 = vpop.f32.mrf.mxu0
  %v110 = vadd.f32 0.0, %v109
  %111 = vmatmul.bf16.gmra.mxu0 %v74
  %v112 = vpop.f32.mrf.mxu0
  %v113 = vadd.f32 0.0, %v112
  %v114 = vpop.f32.mrf.mxu0
  %v115 = vadd.f32 0.0, %v114
  %116 = vmatmul.bf16.gmra.mxu0 %v77
  %v117 = vpop.f32.mrf.mxu0
  %v118 = vadd.f32 0.0, %v117
  %v119 = vpop.f32.mrf.mxu0
  %v120 = vadd.f32 0.0, %v119
  %121 = vmatmul.bf16.gmra.mxu0 %v80
  %v122 = vpop.f32.mrf.mxu0
  %v123 = vadd.f32 0.0, %v122
  %v124 = vpop.f32.mrf.mxu0
  %v125 = vadd.f32 0.0, %v124
  %126 = vdwg.mxu0
  %127 = vmatpush.bf16.msra.mxu0 0
  %128 = vmatpush.bf16.msra.mxu0 0
  %129 = vmatpush.bf16.msra.mxu0 0
  %130 = vmatpush.bf16.msra.mxu0 0
  %131 = vmatpush.bf16.msra.mxu0 0
  %132 = vmatpush.bf16.msra.mxu0 0
  %133 = vmatpush.bf16.msra.mxu0 0
  %134 = vmatpush.bf16.msra.mxu0 %v90
  %135 = vmatmul.bf16.gmra.mxu0 %v71
  %v136 = vpop.f32.mrf.mxu0
  %v137 = vadd.f32 0.0, %v136
  %v138 = vpop.f32.mrf.mxu0
  %v139 = vadd.f32 0.0, %v138
  %140 = vmatmul.bf16.gmra.mxu0 %v74
  %v141 = vpop.f32.mrf.mxu0
  %v142 = vadd.f32 0.0, %v141
  %v143 = vpop.f32.mrf.mxu0
  %v144 = vadd.f32 0.0, %v143
  %145 = vmatmul.bf16.gmra.mxu0 %v77
  %v146 = vpop.f32.mrf.mxu0
  %v147 = vadd.f32 0.0, %v146
  %v148 = vpop.f32.mrf.mxu0
  %v149 = vadd.f32 0.0, %v148
  %150 = vmatmul.bf16.gmra.mxu0 %v80
  %v151 = vpop.f32.mrf.mxu0
  %v152 = vadd.f32 0.0, %v151
  %v153 = vpop.f32.mrf.mxu0
  %v154 = vadd.f32 0.0, %v153
  %155 = vdwg.mxu0
  %156 = vmatpush.bf16.msra.mxu0 0
  %157 = vmatpush.bf16.msra.mxu0 0
  %158 = vmatpush.bf16.msra.mxu0 0
  %159 = vmatpush.bf16.msra.mxu0 0
  %160 = vmatpush.bf16.msra.mxu0 0
  %161 = vmatpush.bf16.msra.mxu0 0
  %162 = vmatpush.bf16.msra.mxu0 0
  %163 = vmatpush.bf16.msra.mxu0 %v93
  %164 = vmatmul.bf16.gmra.mxu0 %v71
  %v165 = vpop.f32.mrf.mxu0
  %v166 = vadd.f32 0.0, %v165
  %v167 = vpop.f32.mrf.mxu0
  %v168 = vadd.f32 0.0, %v167
  %169 = vmatmul.bf16.gmra.mxu0 %v74
  %v170 = vpop.f32.mrf.mxu0
  %v171 = vadd.f32 0.0, %v170
  %v172 = vpop.f32.mrf.mxu0
  %v173 = vadd.f32 0.0, %v172
  %174 = vmatmul.bf16.gmra.mxu0 %v77
  %v175 = vpop.f32.mrf.mxu0
  %v176 = vadd.f32 0.0, %v175
  %v177 = vpop.f32.mrf.mxu0
  %v178 = vadd.f32 0.0, %v177
  %179 = vmatmul.bf16.gmra.mxu0 %v80
  %v180 = vpop.f32.mrf.mxu0
  %v181 = vadd.f32 0.0, %v180
  %v182 = vpop.f32.mrf.mxu0
  %v183 = vadd.f32 0.0, %v182
  %184 = vdwg.mxu0
  %185 = vmatpush.bf16.msra.mxu0 0
  %186 = vmatpush.bf16.msra.mxu0 0
  %187 = vmatpush.bf16.msra.mxu0 0
  %188 = vmatpush.bf16.msra.mxu0 0
  %189 = vmatpush.bf16.msra.mxu0 0
  %190 = vmatpush.bf16.msra.mxu0 0
  %191 = vmatpush.bf16.msra.mxu0 0
  %192 = vmatpush.bf16.msra.mxu0 %v96
  %193 = vmatmul.bf16.gmra.mxu0 %v71
  %v194 = vpop.f32.mrf.mxu0
  %v195 = vadd.f32 0.0, %v194
  %v196 = vpop.f32.mrf.mxu0
  %v197 = vadd.f32 0.0, %v196
  %198 = vmatmul.bf16.gmra.mxu0 %v74
  %v199 = vpop.f32.mrf.mxu0
  %v200 = vadd.f32 0.0, %v199
  %v201 = vpop.f32.mrf.mxu0
  %v202 = vadd.f32 0.0, %v201
  %203 = vmatmul.bf16.gmra.mxu0 %v77
  %v204 = vpop.f32.mrf.mxu0
  %v205 = vadd.f32 0.0, %v204
  %v206 = vpop.f32.mrf.mxu0
  %v207 = vadd.f32 0.0, %v206
  %208 = vmatmul.bf16.gmra.mxu0 %v80
  %v209 = vpop.f32.mrf.mxu0
  %v210 = vadd.f32 0.0, %v209
  %v211 = vpop.f32.mrf.mxu0
  %v212 = vadd.f32 0.0, %v211
  %213 = vdwg.mxu0
  %214 = vst [vmem:[#allocation4] sm:$0xff] %v108
  %215 = vst [vmem:[#allocation4 + $0x8] sm:$0xff] %v137
  %216 = vst [vmem:[#allocation4 + $0x10] sm:$0xff] %v166
  %217 = vst [vmem:[#allocation4 + $0x18] sm:$0xff] %v195
  %218 = vst [vmem:[#allocation4 + $0x20] sm:$0xff] %v110
  %219 = vst [vmem:[#allocation4 + $0x28] sm:$0xff] %v139
  %220 = vst [vmem:[#allocation4 + $0x30] sm:$0xff] %v168
  %221 = vst [vmem:[#allocation4 + $0x38] sm:$0xff] %v197
  %222 = vst [vmem:[#allocation4 + $0x40] sm:$0xff] %v113
  %223 = vst [vmem:[#allocation4 + $0x48] sm:$0xff] %v142
  %224 = vst [vmem:[#allocation4 + $0x50] sm:$0xff] %v171
  %225 = vst [vmem:[#allocation4 + $0x58] sm:$0xff] %v200
  %226 = vst [vmem:[#allocation4 + $0x60] sm:$0xff] %v115
  %227 = vst [vmem:[#allocation4 + $0x68] sm:$0xff] %v144
  %228 = vst [vmem:[#allocation4 + $0x70] sm:$0xff] %v173
  %229 = vst [vmem:[#allocation4 + $0x78] sm:$0xff] %v202
  %230 = vst [vmem:[#allocation4 + $0x80] sm:$0xff] %v118
  %231 = vst [vmem:[#allocation4 + $0x88] sm:$0xff] %v147
  %232 = vst [vmem:[#allocation4 + $0x90] sm:$0xff] %v176
  %233 = vst [vmem:[#allocation4 + $0x98] sm:$0xff] %v205
  %234 = vst [vmem:[#allocation4 + $0xa0] sm:$0xff] %v120
  %235 = vst [vmem:[#allocation4 + $0xa8] sm:$0xff] %v149
  %236 = vst [vmem:[#allocation4 + $0xb0] sm:$0xff] %v178
  %237 = vst [vmem:[#allocation4 + $0xb8] sm:$0xff] %v207
  %238 = vst [vmem:[#allocation4 + $0xc0] sm:$0xff] %v123
  %239 = vst [vmem:[#allocation4 + $0xc8] sm:$0xff] %v152
  %240 = vst [vmem:[#allocation4 + $0xd0] sm:$0xff] %v181
  %241 = vst [vmem:[#allocation4 + $0xd8] sm:$0xff] %v210
  %242 = vst [vmem:[#allocation4 + $0xe0] sm:$0xff] %v125
  %243 = vst [vmem:[#allocation4 + $0xe8] sm:$0xff] %v154
  %244 = vst [vmem:[#allocation4 + $0xf0] sm:$0xff] %v183
  %245 = vst [vmem:[#allocation4 + $0xf8] sm:$0xff] %v212
  %v246 = vld [vmem:[%s2] sm:$0xff]
  %v247 = vld [vmem:[%s2 + $0x8] sm:$0xff]
  %v248 = vld [vmem:[%s2 + $0x10] sm:$0xff]
  %v249 = vld [vmem:[%s2 + $0x18] sm:$0xff]
  %v250 = vld [vmem:[%s2 + $0x20] sm:$0xff]
  %v251 = vld [vmem:[%s2 + $0x28] sm:$0xff]
  %v252 = vld [vmem:[%s2 + $0x30] sm:$0xff]
  %v253 = vld [vmem:[%s2 + $0x38] sm:$0xff]
  %v254 = vld [vmem:[%s2 + $0x40] sm:$0xff]
  %v255 = vld [vmem:[%s2 + $0x48] sm:$0xff]
  %v256 = vld [vmem:[%s2 + $0x50] sm:$0xff]
  %v257 = vld [vmem:[%s2 + $0x58] sm:$0xff]
  %v258 = vld [vmem:[%s2 + $0x60] sm:$0xff]
  %v259 = vld [vmem:[%s2 + $0x68] sm:$0xff]
  %v260 = vld [vmem:[%s2 + $0x70] sm:$0xff]
  %v261 = vld [vmem:[%s2 + $0x78] sm:$0xff]
  %v262 = vld [vmem:[%s2 + $0x80] sm:$0xff]
  %v263 = vld [vmem:[%s2 + $0x88] sm:$0xff]
  %v264 = vld [vmem:[%s2 + $0x90] sm:$0xff]
  %v265 = vld [vmem:[%s2 + $0x98] sm:$0xff]
  %v266 = vld [vmem:[%s2 + $0xa0] sm:$0xff]
  %v267 = vld [vmem:[%s2 + $0xa8] sm:$0xff]
  %v268 = vld [vmem:[%s2 + $0xb0] sm:$0xff]
  %v269 = vld [vmem:[%s2 + $0xb8] sm:$0xff]
  %v270 = vld [vmem:[%s2 + $0xc0] sm:$0xff]
  %v271 = vld [vmem:[%s2 + $0xc8] sm:$0xff]
  %v272 = vld [vmem:[%s2 + $0xd0] sm:$0xff]
  %v273 = vld [vmem:[%s2 + $0xd8] sm:$0xff]
  %v274 = vld [vmem:[%s2 + $0xe0] sm:$0xff]
  %v275 = vld [vmem:[%s2 + $0xe8] sm:$0xff]
  %v276 = vld [vmem:[%s2 + $0xf0] sm:$0xff]
  %v277 = vld [vmem:[%s2 + $0xf8] sm:$0xff]
  %v278 = vld [vmem:[#allocation2] sm:$0xff]
  %v279 = vld [vmem:[#allocation3] sm:$0xff]
  %s280 = smul.u32 0, 4
  %s281 = smul.addr %s280, 8
  %s282 = scalar_lea.vmem [#allocation4], %s281
  %v283 = vld [vmem:[%s282] sm:$0xff]
  %v284 = vld [vmem:[%s282 + $0x8] sm:$0xff]
  %v285 = vld [vmem:[%s282 + $0x10] sm:$0xff]
  %v286 = vld [vmem:[%s282 + $0x18] sm:$0xff]
  %v287 = vpack.c.bf16 %v278, %v278
  %v320 = vunpack.c.l.b16 %v246
  %v321 = vunpack.c.h.b16 %v246
  %v322 = vunpack.c.l.b16 %v247
  %v323 = vunpack.c.h.b16 %v247
  %v324 = vunpack.c.l.b16 %v248
  %v325 = vunpack.c.h.b16 %v248
  %v326 = vunpack.c.l.b16 %v249
  %v327 = vunpack.c.h.b16 %v249
  %v328 = vunpack.c.l.b16 %v250
  %v329 = vunpack.c.h.b16 %v250
  %v330 = vunpack.c.l.b16 %v251
  %v331 = vunpack.c.h.b16 %v251
  %v332 = vunpack.c.l.b16 %v252
  %v333 = vunpack.c.h.b16 %v252
  %v334 = vunpack.c.l.b16 %v253
  %v335 = vunpack.c.h.b16 %v253
  %v336 = vunpack.c.l.b16 %v254
  %v337 = vunpack.c.h.b16 %v254
  %v338 = vunpack.c.l.b16 %v255
  %v339 = vunpack.c.h.b16 %v255
  %v340 = vunpack.c.l.b16 %v256
  %v341 = vunpack.c.h.b16 %v256
  %v342 = vunpack.c.l.b16 %v257
  %v343 = vunpack.c.h.b16 %v257
  %v344 = vunpack.c.l.b16 %v258
  %v345 = vunpack.c.h.b16 %v258
  %v346 = vunpack.c.l.b16 %v259
  %v347 = vunpack.c.h.b16 %v259
  %v348 = vunpack.c.l.b16 %v260
  %v349 = vunpack.c.h.b16 %v260
  %v350 = vunpack.c.l.b16 %v261
  %v351 = vunpack.c.h.b16 %v261
  %v352 = vunpack.c.l.b16 %v262
  %v353 = vunpack.c.h.b16 %v262
  %v354 = vunpack.c.l.b16 %v263
  %v355 = vunpack.c.h.b16 %v263
  %v356 = vunpack.c.l.b16 %v264
  %v357 = vunpack.c.h.b16 %v264
  %v358 = vunpack.c.l.b16 %v265
  %v359 = vunpack.c.h.b16 %v265
  %v360 = vunpack.c.l.b16 %v266
  %v361 = vunpack.c.h.b16 %v266
  %v362 = vunpack.c.l.b16 %v267
  %v363 = vunpack.c.h.b16 %v267
  %v364 = vunpack.c.l.b16 %v268
  %v365 = vunpack.c.h.b16 %v268
  %v366 = vunpack.c.l.b16 %v269
  %v367 = vunpack.c.h.b16 %v269
  %v368 = vunpack.c.l.b16 %v270
  %v369 = vunpack.c.h.b16 %v270
  %v370 = vunpack.c.l.b16 %v271
  %v371 = vunpack.c.h.b16 %v271
  %v372 = vunpack.c.l.b16 %v272
  %v373 = vunpack.c.h.b16 %v272
  %v374 = vunpack.c.l.b16 %v273
  %v375 = vunpack.c.h.b16 %v273
  %v376 = vunpack.c.l.b16 %v274
  %v377 = vunpack.c.h.b16 %v274
  %v378 = vunpack.c.l.b16 %v275
  %v379 = vunpack.c.h.b16 %v275
  %v380 = vunpack.c.l.b16 %v276
  %v381 = vunpack.c.h.b16 %v276
  %v382 = vunpack.c.l.b16 %v277
  %v383 = vunpack.c.h.b16 %v277
  %v384 = vpack.c.b16 %v324, %v320
  %v385 = vpack.c.b16 %v325, %v321
  %v386 = vpack.c.b16 %v326, %v322
  %v387 = vpack.c.b16 %v327, %v323
  %v388 = vpack.c.b16 %v332, %v328
  %v389 = vpack.c.b16 %v333, %v329
  %v390 = vpack.c.b16 %v334, %v330
  %v391 = vpack.c.b16 %v335, %v331
  %v392 = vpack.c.b16 %v340, %v336
  %v393 = vpack.c.b16 %v341, %v337
  %v394 = vpack.c.b16 %v342, %v338
  %v395 = vpack.c.b16 %v343, %v339
  %v396 = vpack.c.b16 %v348, %v344
  %v397 = vpack.c.b16 %v349, %v345
  %v398 = vpack.c.b16 %v350, %v346
  %v399 = vpack.c.b16 %v351, %v347
  %v400 = vpack.c.b16 %v356, %v352
  %v401 = vpack.c.b16 %v357, %v353
  %v402 = vpack.c.b16 %v358, %v354
  %v403 = vpack.c.b16 %v359, %v355
  %v404 = vpack.c.b16 %v364, %v360
  %v405 = vpack.c.b16 %v365, %v361
  %v406 = vpack.c.b16 %v366, %v362
  %v407 = vpack.c.b16 %v367, %v363
  %v408 = vpack.c.b16 %v372, %v368
  %v409 = vpack.c.b16 %v373, %v369
  %v410 = vpack.c.b16 %v374, %v370
  %v411 = vpack.c.b16 %v375, %v371
  %v412 = vpack.c.b16 %v380, %v376
  %v413 = vpack.c.b16 %v381, %v377
  %v414 = vpack.c.b16 %v382, %v378
  %v415 = vpack.c.b16 %v383, %v379
  %448 = vmatpush.bf16.msra.mxu0 %v412
  %449 = vmatpush.bf16.msra.mxu0 %v408
  %450 = vmatpush.bf16.msra.mxu0 %v404
  %451 = vmatpush.bf16.msra.mxu0 %v400
  %452 = vmatpush.bf16.msra.mxu0 %v396
  %453 = vmatpush.bf16.msra.mxu0 %v392
  %454 = vmatpush.bf16.msra.mxu0 %v388
  %455 = vmatpush.bf16.msra.mxu0 %v384
  %456 = vmatmul.bf16.gmra.mxu0 %v287
  %v457 = vpop.f32.mrf.mxu0
  %v458 = vadd.f32 0.0, %v457
  %v459 = vpop.f32.mrf.mxu0
  %460 = vdwg.mxu0
  %461 = vmatpush.bf16.msra.mxu0 %v413
  %462 = vmatpush.bf16.msra.mxu0 %v409
  %463 = vmatpush.bf16.msra.mxu0 %v405
  %464 = vmatpush.bf16.msra.mxu0 %v401
  %465 = vmatpush.bf16.msra.mxu0 %v397
  %466 = vmatpush.bf16.msra.mxu0 %v393
  %467 = vmatpush.bf16.msra.mxu0 %v389
  %468 = vmatpush.bf16.msra.mxu0 %v385
  %469 = vmatmul.bf16.gmra.mxu0 %v287
  %v470 = vpop.f32.mrf.mxu0
  %v471 = vadd.f32 0.0, %v470
  %v472 = vpop.f32.mrf.mxu0
  %473 = vdwg.mxu0
  %474 = vmatpush.bf16.msra.mxu0 %v414
  %475 = vmatpush.bf16.msra.mxu0 %v410
  %476 = vmatpush.bf16.msra.mxu0 %v406
  %477 = vmatpush.bf16.msra.mxu0 %v402
  %478 = vmatpush.bf16.msra.mxu0 %v398
  %479 = vmatpush.bf16.msra.mxu0 %v394
  %480 = vmatpush.bf16.msra.mxu0 %v390
  %481 = vmatpush.bf16.msra.mxu0 %v386
  %482 = vmatmul.bf16.gmra.mxu0 %v287
  %v483 = vpop.f32.mrf.mxu0
  %v484 = vadd.f32 0.0, %v483
  %v485 = vpop.f32.mrf.mxu0
  %486 = vdwg.mxu0
  %487 = vmatpush.bf16.msra.mxu0 %v415
  %488 = vmatpush.bf16.msra.mxu0 %v411
  %489 = vmatpush.bf16.msra.mxu0 %v407
  %490 = vmatpush.bf16.msra.mxu0 %v403
  %491 = vmatpush.bf16.msra.mxu0 %v399
  %492 = vmatpush.bf16.msra.mxu0 %v395
  %493 = vmatpush.bf16.msra.mxu0 %v391
  %494 = vmatpush.bf16.msra.mxu0 %v387
  %495 = vmatmul.bf16.gmra.mxu0 %v287
  %v496 = vpop.f32.mrf.mxu0
  %v497 = vadd.f32 0.0, %v496
  %v498 = vpop.f32.mrf.mxu0
  %499 = vdwg.mxu0
  %v500 = vadd.f32 %v283, %v458
  %v501 = vadd.f32 %v284, %v471
  %v502 = vadd.f32 %v285, %v484
  %v503 = vadd.f32 %v286, %v497
  %v504 = vmul.f32 %v500, 0.5
  %v505 = vtanh.pop %v504
  %v506 = vmul.f32 %v505, 0.5
  %v507 = vadd.f32 %v506, 0.5
  %v508 = vmul.f32 %v501, 0.5
  %v509 = vtanh.pop %v508
  %v510 = vmul.f32 %v509, 0.5
  %v511 = vadd.f32 %v510, 0.5
  %v512 = vtanh.pop %v502
  %v513 = vmul.f32 %v503, 0.5
  %v514 = vtanh.pop %v513
  %v515 = vmul.f32 %v514, 0.5
  %v516 = vadd.f32 %v515, 0.5
  %v517 = vmul.f32 %v511, %v279
  %v518 = vmul.f32 %v507, %v512
  %v519 = vadd.f32 %v517, %v518
  %v520 = vtanh.pop %v519
  %v521 = vmul.f32 %v516, %v520
  %s522 = smul.u32 1, 4
  %s523 = smul.addr %s522, 8
  %s524 = scalar_lea.vmem [#allocation4], %s523
  %v525 = vld [vmem:[%s524] sm:$0xff]
  %v526 = vld [vmem:[%s524 + $0x8] sm:$0xff]
  %v527 = vld [vmem:[%s524 + $0x10] sm:$0xff]
  %v528 = vld [vmem:[%s524 + $0x18] sm:$0xff]
  %v529 = vpack.c.bf16 %v521, %v521
  %530 = vmatpush.bf16.msra.mxu0 %v412
  %531 = vmatpush.bf16.msra.mxu0 %v408
  %532 = vmatpush.bf16.msra.mxu0 %v404
  %533 = vmatpush.bf16.msra.mxu0 %v400
  %534 = vmatpush.bf16.msra.mxu0 %v396
  %535 = vmatpush.bf16.msra.mxu0 %v392
  %536 = vmatpush.bf16.msra.mxu0 %v388
  %537 = vmatpush.bf16.msra.mxu0 %v384
  %538 = vmatmul.bf16.gmra.mxu0 %v529
  %v539 = vpop.f32.mrf.mxu0
  %v540 = vadd.f32 0.0, %v539
  %v541 = vpop.f32.mrf.mxu0
  %542 = vdwg.mxu0
  %543 = vmatpush.bf16.msra.mxu0 %v413
  %544 = vmatpush.bf16.msra.mxu0 %v409
  %545 = vmatpush.bf16.msra.mxu0 %v405
  %546 = vmatpush.bf16.msra.mxu0 %v401
  %547 = vmatpush.bf16.msra.mxu0 %v397
  %548 = vmatpush.bf16.msra.mxu0 %v393
  %549 = vmatpush.bf16.msra.mxu0 %v389
  %550 = vmatpush.bf16.msra.mxu0 %v385
  %551 = vmatmul.bf16.gmra.mxu0 %v529
  %v552 = vpop.f32.mrf.mxu0
  %v553 = vadd.f32 0.0, %v552
  %v554 = vpop.f32.mrf.mxu0
  %555 = vdwg.mxu0
  %556 = vmatpush.bf16.msra.mxu0 %v414
  %557 = vmatpush.bf16.msra.mxu0 %v410
  %558 = vmatpush.bf16.msra.mxu0 %v406
  %559 = vmatpush.bf16.msra.mxu0 %v402
  %560 = vmatpush.bf16.msra.mxu0 %v398
  %561 = vmatpush.bf16.msra.mxu0 %v394
  %562 = vmatpush.bf16.msra.mxu0 %v390
  %563 = vmatpush.bf16.msra.mxu0 %v386
  %564 = vmatmul.bf16.gmra.mxu0 %v529
  %v565 = vpop.f32.mrf.mxu0
  %v566 = vadd.f32 0.0, %v565
  %v567 = vpop.f32.mrf.mxu0
  %568 = vdwg.mxu0
  %569 = vmatpush.bf16.msra.mxu0 %v415
  %570 = vmatpush.bf16.msra.mxu0 %v411
  %571 = vmatpush.bf16.msra.mxu0 %v407
  %572 = vmatpush.bf16.msra.mxu0 %v403
  %573 = vmatpush.bf16.msra.mxu0 %v399
  %574 = vmatpush.bf16.msra.mxu0 %v395
  %575 = vmatpush.bf16.msra.mxu0 %v391
  %576 = vmatpush.bf16.msra.mxu0 %v387
  %577 = vmatmul.bf16.gmra.mxu0 %v529
  %v578 = vpop.f32.mrf.mxu0
  %v579 = vadd.f32 0.0, %v578
  %v580 = vpop.f32.mrf.mxu0
  %581 = vdwg.mxu0
  %v582 = vadd.f32 %v525, %v540
  %v583 = vadd.f32 %v526, %v553
  %v584 = vadd.f32 %v527, %v566
  %v585 = vadd.f32 %v528, %v579
  %v586 = vmul.f32 %v582, 0.5
  %v587 = vtanh.pop %v586
  %v588 = vmul.f32 %v587, 0.5
  %v589 = vadd.f32 %v588, 0.5
  %v590 = vmul.f32 %v583, 0.5
  %v591 = vtanh.pop %v590
  %v592 = vmul.f32 %v591, 0.5
  %v593 = vadd.f32 %v592, 0.5
  %v594 = vtanh.pop %v584
  %v595 = vmul.f32 %v585, 0.5
  %v596 = vtanh.pop %v595
  %v597 = vmul.f32 %v596, 0.5
  %v598 = vadd.f32 %v597, 0.5
  %v599 = vmul.f32 %v593, %v519
  %v600 = vmul.f32 %v589, %v594
  %v601 = vadd.f32 %v599, %v600
  %v602 = vtanh.pop %v601
  %v603 = vmul.f32 %v598, %v602
  %s604 = smul.u32 2, 4
  %s605 = smul.addr %s604, 8
  %s606 = scalar_lea.vmem [#allocation4], %s605
  %v607 = vld [vmem:[%s606] sm:$0xff]
  %v608 = vld [vmem:[%s606 + $0x8] sm:$0xff]
  %v609 = vld [vmem:[%s606 + $0x10] sm:$0xff]
  %v610 = vld [vmem:[%s606 + $0x18] sm:$0xff]
  %v611 = vpack.c.bf16 %v603, %v603
  %612 = vmatpush.bf16.msra.mxu0 %v412
  %613 = vmatpush.bf16.msra.mxu0 %v408
  %614 = vmatpush.bf16.msra.mxu0 %v404
  %615 = vmatpush.bf16.msra.mxu0 %v400
  %616 = vmatpush.bf16.msra.mxu0 %v396
  %617 = vmatpush.bf16.msra.mxu0 %v392
  %618 = vmatpush.bf16.msra.mxu0 %v388
  %619 = vmatpush.bf16.msra.mxu0 %v384
  %620 = vmatmul.bf16.gmra.mxu0 %v611
  %v621 = vpop.f32.mrf.mxu0
  %v622 = vadd.f32 0.0, %v621
  %v623 = vpop.f32.mrf.mxu0
  %624 = vdwg.mxu0
  %625 = vmatpush.bf16.msra.mxu0 %v413
  %626 = vmatpush.bf16.msra.mxu0 %v409
  %627 = vmatpush.bf16.msra.mxu0 %v405
  %628 = vmatpush.bf16.msra.mxu0 %v401
  %629 = vmatpush.bf16.msra.mxu0 %v397
  %630 = vmatpush.bf16.msra.mxu0 %v393
  %631 = vmatpush.bf16.msra.mxu0 %v389
  %632 = vmatpush.bf16.msra.mxu0 %v385
  %633 = vmatmul.bf16.gmra.mxu0 %v611
  %v634 = vpop.f32.mrf.mxu0
  %v635 = vadd.f32 0.0, %v634
  %v636 = vpop.f32.mrf.mxu0
  %637 = vdwg.mxu0
  %638 = vmatpush.bf16.msra.mxu0 %v414
  %639 = vmatpush.bf16.msra.mxu0 %v410
  %640 = vmatpush.bf16.msra.mxu0 %v406
  %641 = vmatpush.bf16.msra.mxu0 %v402
  %642 = vmatpush.bf16.msra.mxu0 %v398
  %643 = vmatpush.bf16.msra.mxu0 %v394
  %644 = vmatpush.bf16.msra.mxu0 %v390
  %645 = vmatpush.bf16.msra.mxu0 %v386
  %646 = vmatmul.bf16.gmra.mxu0 %v611
  %v647 = vpop.f32.mrf.mxu0
  %v648 = vadd.f32 0.0, %v647
  %v649 = vpop.f32.mrf.mxu0
  %650 = vdwg.mxu0
  %651 = vmatpush.bf16.msra.mxu0 %v415
  %652 = vmatpush.bf16.msra.mxu0 %v411
  %653 = vmatpush.bf16.msra.mxu0 %v407
  %654 = vmatpush.bf16.msra.mxu0 %v403
  %655 = vmatpush.bf16.msra.mxu0 %v399
  %656 = vmatpush.bf16.msra.mxu0 %v395
  %657 = vmatpush.bf16.msra.mxu0 %v391
  %658 = vmatpush.bf16.msra.mxu0 %v387
  %659 = vmatmul.bf16.gmra.mxu0 %v611
  %v660 = vpop.f32.mrf.mxu0
  %v661 = vadd.f32 0.0, %v660
  %v662 = vpop.f32.mrf.mxu0
  %663 = vdwg.mxu0
  %v664 = vadd.f32 %v607, %v622
  %v665 = vadd.f32 %v608, %v635
  %v666 = vadd.f32 %v609, %v648
  %v667 = vadd.f32 %v610, %v661
  %v668 = vmul.f32 %v664, 0.5
  %v669 = vtanh.pop %v668
  %v670 = vmul.f32 %v669, 0.5
  %v671 = vadd.f32 %v670, 0.5
  %v672 = vmul.f32 %v665, 0.5
  %v673 = vtanh.pop %v672
  %v674 = vmul.f32 %v673, 0.5
  %v675 = vadd.f32 %v674, 0.5
  %v676 = vtanh.pop %v666
  %v677 = vmul.f32 %v667, 0.5
  %v678 = vtanh.pop %v677
  %v679 = vmul.f32 %v678, 0.5
  %v680 = vadd.f32 %v679, 0.5
  %v681 = vmul.f32 %v675, %v601
  %v682 = vmul.f32 %v671, %v676
  %v683 = vadd.f32 %v681, %v682
  %v684 = vtanh.pop %v683
  %v685 = vmul.f32 %v680, %v684
  %s686 = smul.u32 3, 4
  %s687 = smul.addr %s686, 8
  %s688 = scalar_lea.vmem [#allocation4], %s687
  %v689 = vld [vmem:[%s688] sm:$0xff]
  %v690 = vld [vmem:[%s688 + $0x8] sm:$0xff]
  %v691 = vld [vmem:[%s688 + $0x10] sm:$0xff]
  %v692 = vld [vmem:[%s688 + $0x18] sm:$0xff]
  %v693 = vpack.c.bf16 %v685, %v685
  %694 = vmatpush.bf16.msra.mxu0 %v412
  %695 = vmatpush.bf16.msra.mxu0 %v408
  %696 = vmatpush.bf16.msra.mxu0 %v404
  %697 = vmatpush.bf16.msra.mxu0 %v400
  %698 = vmatpush.bf16.msra.mxu0 %v396
  %699 = vmatpush.bf16.msra.mxu0 %v392
  %700 = vmatpush.bf16.msra.mxu0 %v388
  %701 = vmatpush.bf16.msra.mxu0 %v384
  %702 = vmatmul.bf16.gmra.mxu0 %v693
  %v703 = vpop.f32.mrf.mxu0
  %v704 = vadd.f32 0.0, %v703
  %v705 = vpop.f32.mrf.mxu0
  %706 = vdwg.mxu0
  %707 = vmatpush.bf16.msra.mxu0 %v413
  %708 = vmatpush.bf16.msra.mxu0 %v409
  %709 = vmatpush.bf16.msra.mxu0 %v405
  %710 = vmatpush.bf16.msra.mxu0 %v401
  %711 = vmatpush.bf16.msra.mxu0 %v397
  %712 = vmatpush.bf16.msra.mxu0 %v393
  %713 = vmatpush.bf16.msra.mxu0 %v389
  %714 = vmatpush.bf16.msra.mxu0 %v385
  %715 = vmatmul.bf16.gmra.mxu0 %v693
  %v716 = vpop.f32.mrf.mxu0
  %v717 = vadd.f32 0.0, %v716
  %v718 = vpop.f32.mrf.mxu0
  %719 = vdwg.mxu0
  %720 = vmatpush.bf16.msra.mxu0 %v414
  %721 = vmatpush.bf16.msra.mxu0 %v410
  %722 = vmatpush.bf16.msra.mxu0 %v406
  %723 = vmatpush.bf16.msra.mxu0 %v402
  %724 = vmatpush.bf16.msra.mxu0 %v398
  %725 = vmatpush.bf16.msra.mxu0 %v394
  %726 = vmatpush.bf16.msra.mxu0 %v390
  %727 = vmatpush.bf16.msra.mxu0 %v386
  %728 = vmatmul.bf16.gmra.mxu0 %v693
  %v729 = vpop.f32.mrf.mxu0
  %v730 = vadd.f32 0.0, %v729
  %v731 = vpop.f32.mrf.mxu0
  %732 = vdwg.mxu0
  %733 = vmatpush.bf16.msra.mxu0 %v415
  %734 = vmatpush.bf16.msra.mxu0 %v411
  %735 = vmatpush.bf16.msra.mxu0 %v407
  %736 = vmatpush.bf16.msra.mxu0 %v403
  %737 = vmatpush.bf16.msra.mxu0 %v399
  %738 = vmatpush.bf16.msra.mxu0 %v395
  %739 = vmatpush.bf16.msra.mxu0 %v391
  %740 = vmatpush.bf16.msra.mxu0 %v387
  %741 = vmatmul.bf16.gmra.mxu0 %v693
  %v742 = vpop.f32.mrf.mxu0
  %v743 = vadd.f32 0.0, %v742
  %v744 = vpop.f32.mrf.mxu0
  %745 = vdwg.mxu0
  %v746 = vadd.f32 %v689, %v704
  %v747 = vadd.f32 %v690, %v717
  %v748 = vadd.f32 %v691, %v730
  %v749 = vadd.f32 %v692, %v743
  %v750 = vmul.f32 %v746, 0.5
  %v751 = vtanh.pop %v750
  %v752 = vmul.f32 %v751, 0.5
  %v753 = vadd.f32 %v752, 0.5
  %v754 = vmul.f32 %v747, 0.5
  %v755 = vtanh.pop %v754
  %v756 = vmul.f32 %v755, 0.5
  %v757 = vadd.f32 %v756, 0.5
  %v758 = vtanh.pop %v748
  %v759 = vmul.f32 %v749, 0.5
  %v760 = vtanh.pop %v759
  %v761 = vmul.f32 %v760, 0.5
  %v762 = vadd.f32 %v761, 0.5
  %v763 = vmul.f32 %v757, %v683
  %v764 = vmul.f32 %v753, %v758
  %v765 = vadd.f32 %v763, %v764
  %v766 = vtanh.pop %v765
  %v767 = vmul.f32 %v762, %v766
  %s768 = smul.u32 4, 4
  %s769 = smul.addr %s768, 8
  %s770 = scalar_lea.vmem [#allocation4], %s769
  %v771 = vld [vmem:[%s770] sm:$0xff]
  %v772 = vld [vmem:[%s770 + $0x8] sm:$0xff]
  %v773 = vld [vmem:[%s770 + $0x10] sm:$0xff]
  %v774 = vld [vmem:[%s770 + $0x18] sm:$0xff]
  %v775 = vpack.c.bf16 %v767, %v767
  %776 = vmatpush.bf16.msra.mxu0 %v412
  %777 = vmatpush.bf16.msra.mxu0 %v408
  %778 = vmatpush.bf16.msra.mxu0 %v404
  %779 = vmatpush.bf16.msra.mxu0 %v400
  %780 = vmatpush.bf16.msra.mxu0 %v396
  %781 = vmatpush.bf16.msra.mxu0 %v392
  %782 = vmatpush.bf16.msra.mxu0 %v388
  %783 = vmatpush.bf16.msra.mxu0 %v384
  %784 = vmatmul.bf16.gmra.mxu0 %v775
  %v785 = vpop.f32.mrf.mxu0
  %v786 = vadd.f32 0.0, %v785
  %v787 = vpop.f32.mrf.mxu0
  %788 = vdwg.mxu0
  %789 = vmatpush.bf16.msra.mxu0 %v413
  %790 = vmatpush.bf16.msra.mxu0 %v409
  %791 = vmatpush.bf16.msra.mxu0 %v405
  %792 = vmatpush.bf16.msra.mxu0 %v401
  %793 = vmatpush.bf16.msra.mxu0 %v397
  %794 = vmatpush.bf16.msra.mxu0 %v393
  %795 = vmatpush.bf16.msra.mxu0 %v389
  %796 = vmatpush.bf16.msra.mxu0 %v385
  %797 = vmatmul.bf16.gmra.mxu0 %v775
  %v798 = vpop.f32.mrf.mxu0
  %v799 = vadd.f32 0.0, %v798
  %v800 = vpop.f32.mrf.mxu0
  %801 = vdwg.mxu0
  %802 = vmatpush.bf16.msra.mxu0 %v414
  %803 = vmatpush.bf16.msra.mxu0 %v410
  %804 = vmatpush.bf16.msra.mxu0 %v406
  %805 = vmatpush.bf16.msra.mxu0 %v402
  %806 = vmatpush.bf16.msra.mxu0 %v398
  %807 = vmatpush.bf16.msra.mxu0 %v394
  %808 = vmatpush.bf16.msra.mxu0 %v390
  %809 = vmatpush.bf16.msra.mxu0 %v386
  %810 = vmatmul.bf16.gmra.mxu0 %v775
  %v811 = vpop.f32.mrf.mxu0
  %v812 = vadd.f32 0.0, %v811
  %v813 = vpop.f32.mrf.mxu0
  %814 = vdwg.mxu0
  %815 = vmatpush.bf16.msra.mxu0 %v415
  %816 = vmatpush.bf16.msra.mxu0 %v411
  %817 = vmatpush.bf16.msra.mxu0 %v407
  %818 = vmatpush.bf16.msra.mxu0 %v403
  %819 = vmatpush.bf16.msra.mxu0 %v399
  %820 = vmatpush.bf16.msra.mxu0 %v395
  %821 = vmatpush.bf16.msra.mxu0 %v391
  %822 = vmatpush.bf16.msra.mxu0 %v387
  %823 = vmatmul.bf16.gmra.mxu0 %v775
  %v824 = vpop.f32.mrf.mxu0
  %v825 = vadd.f32 0.0, %v824
  %v826 = vpop.f32.mrf.mxu0
  %827 = vdwg.mxu0
  %v828 = vadd.f32 %v771, %v786
  %v829 = vadd.f32 %v772, %v799
  %v830 = vadd.f32 %v773, %v812
  %v831 = vadd.f32 %v774, %v825
  %v832 = vmul.f32 %v828, 0.5
  %v833 = vtanh.pop %v832
  %v834 = vmul.f32 %v833, 0.5
  %v835 = vadd.f32 %v834, 0.5
  %v836 = vmul.f32 %v829, 0.5
  %v837 = vtanh.pop %v836
  %v838 = vmul.f32 %v837, 0.5
  %v839 = vadd.f32 %v838, 0.5
  %v840 = vtanh.pop %v830
  %v841 = vmul.f32 %v831, 0.5
  %v842 = vtanh.pop %v841
  %v843 = vmul.f32 %v842, 0.5
  %v844 = vadd.f32 %v843, 0.5
  %v845 = vmul.f32 %v839, %v765
  %v846 = vmul.f32 %v835, %v840
  %v847 = vadd.f32 %v845, %v846
  %v848 = vtanh.pop %v847
  %v849 = vmul.f32 %v844, %v848
  %s850 = smul.u32 5, 4
  %s851 = smul.addr %s850, 8
  %s852 = scalar_lea.vmem [#allocation4], %s851
  %v853 = vld [vmem:[%s852] sm:$0xff]
  %v854 = vld [vmem:[%s852 + $0x8] sm:$0xff]
  %v855 = vld [vmem:[%s852 + $0x10] sm:$0xff]
  %v856 = vld [vmem:[%s852 + $0x18] sm:$0xff]
  %v857 = vpack.c.bf16 %v849, %v849
  %858 = vmatpush.bf16.msra.mxu0 %v412
  %859 = vmatpush.bf16.msra.mxu0 %v408
  %860 = vmatpush.bf16.msra.mxu0 %v404
  %861 = vmatpush.bf16.msra.mxu0 %v400
  %862 = vmatpush.bf16.msra.mxu0 %v396
  %863 = vmatpush.bf16.msra.mxu0 %v392
  %864 = vmatpush.bf16.msra.mxu0 %v388
  %865 = vmatpush.bf16.msra.mxu0 %v384
  %866 = vmatmul.bf16.gmra.mxu0 %v857
  %v867 = vpop.f32.mrf.mxu0
  %v868 = vadd.f32 0.0, %v867
  %v869 = vpop.f32.mrf.mxu0
  %870 = vdwg.mxu0
  %871 = vmatpush.bf16.msra.mxu0 %v413
  %872 = vmatpush.bf16.msra.mxu0 %v409
  %873 = vmatpush.bf16.msra.mxu0 %v405
  %874 = vmatpush.bf16.msra.mxu0 %v401
  %875 = vmatpush.bf16.msra.mxu0 %v397
  %876 = vmatpush.bf16.msra.mxu0 %v393
  %877 = vmatpush.bf16.msra.mxu0 %v389
  %878 = vmatpush.bf16.msra.mxu0 %v385
  %879 = vmatmul.bf16.gmra.mxu0 %v857
  %v880 = vpop.f32.mrf.mxu0
  %v881 = vadd.f32 0.0, %v880
  %v882 = vpop.f32.mrf.mxu0
  %883 = vdwg.mxu0
  %884 = vmatpush.bf16.msra.mxu0 %v414
  %885 = vmatpush.bf16.msra.mxu0 %v410
  %886 = vmatpush.bf16.msra.mxu0 %v406
  %887 = vmatpush.bf16.msra.mxu0 %v402
  %888 = vmatpush.bf16.msra.mxu0 %v398
  %889 = vmatpush.bf16.msra.mxu0 %v394
  %890 = vmatpush.bf16.msra.mxu0 %v390
  %891 = vmatpush.bf16.msra.mxu0 %v386
  %892 = vmatmul.bf16.gmra.mxu0 %v857
  %v893 = vpop.f32.mrf.mxu0
  %v894 = vadd.f32 0.0, %v893
  %v895 = vpop.f32.mrf.mxu0
  %896 = vdwg.mxu0
  %897 = vmatpush.bf16.msra.mxu0 %v415
  %898 = vmatpush.bf16.msra.mxu0 %v411
  %899 = vmatpush.bf16.msra.mxu0 %v407
  %900 = vmatpush.bf16.msra.mxu0 %v403
  %901 = vmatpush.bf16.msra.mxu0 %v399
  %902 = vmatpush.bf16.msra.mxu0 %v395
  %903 = vmatpush.bf16.msra.mxu0 %v391
  %904 = vmatpush.bf16.msra.mxu0 %v387
  %905 = vmatmul.bf16.gmra.mxu0 %v857
  %v906 = vpop.f32.mrf.mxu0
  %v907 = vadd.f32 0.0, %v906
  %v908 = vpop.f32.mrf.mxu0
  %909 = vdwg.mxu0
  %v910 = vadd.f32 %v853, %v868
  %v911 = vadd.f32 %v854, %v881
  %v912 = vadd.f32 %v855, %v894
  %v913 = vadd.f32 %v856, %v907
  %v914 = vmul.f32 %v910, 0.5
  %v915 = vtanh.pop %v914
  %v916 = vmul.f32 %v915, 0.5
  %v917 = vadd.f32 %v916, 0.5
  %v918 = vmul.f32 %v911, 0.5
  %v919 = vtanh.pop %v918
  %v920 = vmul.f32 %v919, 0.5
  %v921 = vadd.f32 %v920, 0.5
  %v922 = vtanh.pop %v912
  %v923 = vmul.f32 %v913, 0.5
  %v924 = vtanh.pop %v923
  %v925 = vmul.f32 %v924, 0.5
  %v926 = vadd.f32 %v925, 0.5
  %v927 = vmul.f32 %v921, %v847
  %v928 = vmul.f32 %v917, %v922
  %v929 = vadd.f32 %v927, %v928
  %v930 = vtanh.pop %v929
  %v931 = vmul.f32 %v926, %v930
  %s932 = smul.u32 6, 4
  %s933 = smul.addr %s932, 8
  %s934 = scalar_lea.vmem [#allocation4], %s933
  %v935 = vld [vmem:[%s934] sm:$0xff]
  %v936 = vld [vmem:[%s934 + $0x8] sm:$0xff]
  %v937 = vld [vmem:[%s934 + $0x10] sm:$0xff]
  %v938 = vld [vmem:[%s934 + $0x18] sm:$0xff]
  %v939 = vpack.c.bf16 %v931, %v931
  %940 = vmatpush.bf16.msra.mxu0 %v412
  %941 = vmatpush.bf16.msra.mxu0 %v408
  %942 = vmatpush.bf16.msra.mxu0 %v404
  %943 = vmatpush.bf16.msra.mxu0 %v400
  %944 = vmatpush.bf16.msra.mxu0 %v396
  %945 = vmatpush.bf16.msra.mxu0 %v392
  %946 = vmatpush.bf16.msra.mxu0 %v388
  %947 = vmatpush.bf16.msra.mxu0 %v384
  %948 = vmatmul.bf16.gmra.mxu0 %v939
  %v949 = vpop.f32.mrf.mxu0
  %v950 = vadd.f32 0.0, %v949
  %v951 = vpop.f32.mrf.mxu0
  %952 = vdwg.mxu0
  %953 = vmatpush.bf16.msra.mxu0 %v413
  %954 = vmatpush.bf16.msra.mxu0 %v409
  %955 = vmatpush.bf16.msra.mxu0 %v405
  %956 = vmatpush.bf16.msra.mxu0 %v401
  %957 = vmatpush.bf16.msra.mxu0 %v397
  %958 = vmatpush.bf16.msra.mxu0 %v393
  %959 = vmatpush.bf16.msra.mxu0 %v389
  %960 = vmatpush.bf16.msra.mxu0 %v385
  %961 = vmatmul.bf16.gmra.mxu0 %v939
  %v962 = vpop.f32.mrf.mxu0
  %v963 = vadd.f32 0.0, %v962
  %v964 = vpop.f32.mrf.mxu0
  %965 = vdwg.mxu0
  %966 = vmatpush.bf16.msra.mxu0 %v414
  %967 = vmatpush.bf16.msra.mxu0 %v410
  %968 = vmatpush.bf16.msra.mxu0 %v406
  %969 = vmatpush.bf16.msra.mxu0 %v402
  %970 = vmatpush.bf16.msra.mxu0 %v398
  %971 = vmatpush.bf16.msra.mxu0 %v394
  %972 = vmatpush.bf16.msra.mxu0 %v390
  %973 = vmatpush.bf16.msra.mxu0 %v386
  %974 = vmatmul.bf16.gmra.mxu0 %v939
  %v975 = vpop.f32.mrf.mxu0
  %v976 = vadd.f32 0.0, %v975
  %v977 = vpop.f32.mrf.mxu0
  %978 = vdwg.mxu0
  %979 = vmatpush.bf16.msra.mxu0 %v415
  %980 = vmatpush.bf16.msra.mxu0 %v411
  %981 = vmatpush.bf16.msra.mxu0 %v407
  %982 = vmatpush.bf16.msra.mxu0 %v403
  %983 = vmatpush.bf16.msra.mxu0 %v399
  %984 = vmatpush.bf16.msra.mxu0 %v395
  %985 = vmatpush.bf16.msra.mxu0 %v391
  %986 = vmatpush.bf16.msra.mxu0 %v387
  %987 = vmatmul.bf16.gmra.mxu0 %v939
  %v988 = vpop.f32.mrf.mxu0
  %v989 = vadd.f32 0.0, %v988
  %v990 = vpop.f32.mrf.mxu0
  %991 = vdwg.mxu0
  %v992 = vadd.f32 %v935, %v950
  %v993 = vadd.f32 %v936, %v963
  %v994 = vadd.f32 %v937, %v976
  %v995 = vadd.f32 %v938, %v989
  %v996 = vmul.f32 %v992, 0.5
  %v997 = vtanh.pop %v996
  %v998 = vmul.f32 %v997, 0.5
  %v999 = vadd.f32 %v998, 0.5
  %v1000 = vmul.f32 %v993, 0.5
  %v1001 = vtanh.pop %v1000
  %v1002 = vmul.f32 %v1001, 0.5
  %v1003 = vadd.f32 %v1002, 0.5
  %v1004 = vtanh.pop %v994
  %v1005 = vmul.f32 %v995, 0.5
  %v1006 = vtanh.pop %v1005
  %v1007 = vmul.f32 %v1006, 0.5
  %v1008 = vadd.f32 %v1007, 0.5
  %v1009 = vmul.f32 %v1003, %v929
  %v1010 = vmul.f32 %v999, %v1004
  %v1011 = vadd.f32 %v1009, %v1010
  %v1012 = vtanh.pop %v1011
  %v1013 = vmul.f32 %v1008, %v1012
  %s1014 = smul.u32 7, 4
  %s1015 = smul.addr %s1014, 8
  %s1016 = scalar_lea.vmem [#allocation4], %s1015
  %v1017 = vld [vmem:[%s1016] sm:$0xff]
  %v1018 = vld [vmem:[%s1016 + $0x8] sm:$0xff]
  %v1019 = vld [vmem:[%s1016 + $0x10] sm:$0xff]
  %v1020 = vld [vmem:[%s1016 + $0x18] sm:$0xff]
  %v1021 = vpack.c.bf16 %v1013, %v1013
  %1022 = vmatpush.bf16.msra.mxu0 %v412
  %1023 = vmatpush.bf16.msra.mxu0 %v408
  %1024 = vmatpush.bf16.msra.mxu0 %v404
  %1025 = vmatpush.bf16.msra.mxu0 %v400
  %1026 = vmatpush.bf16.msra.mxu0 %v396
  %1027 = vmatpush.bf16.msra.mxu0 %v392
  %1028 = vmatpush.bf16.msra.mxu0 %v388
  %1029 = vmatpush.bf16.msra.mxu0 %v384
  %1030 = vmatmul.bf16.gmra.mxu0 %v1021
  %v1031 = vpop.f32.mrf.mxu0
  %v1032 = vadd.f32 0.0, %v1031
  %v1033 = vpop.f32.mrf.mxu0
  %1034 = vdwg.mxu0
  %1035 = vmatpush.bf16.msra.mxu0 %v413
  %1036 = vmatpush.bf16.msra.mxu0 %v409
  %1037 = vmatpush.bf16.msra.mxu0 %v405
  %1038 = vmatpush.bf16.msra.mxu0 %v401
  %1039 = vmatpush.bf16.msra.mxu0 %v397
  %1040 = vmatpush.bf16.msra.mxu0 %v393
  %1041 = vmatpush.bf16.msra.mxu0 %v389
  %1042 = vmatpush.bf16.msra.mxu0 %v385
  %1043 = vmatmul.bf16.gmra.mxu0 %v1021
  %v1044 = vpop.f32.mrf.mxu0
  %v1045 = vadd.f32 0.0, %v1044
  %v1046 = vpop.f32.mrf.mxu0
  %1047 = vdwg.mxu0
  %1048 = vmatpush.bf16.msra.mxu0 %v414
  %1049 = vmatpush.bf16.msra.mxu0 %v410
  %1050 = vmatpush.bf16.msra.mxu0 %v406
  %1051 = vmatpush.bf16.msra.mxu0 %v402
  %1052 = vmatpush.bf16.msra.mxu0 %v398
  %1053 = vmatpush.bf16.msra.mxu0 %v394
  %1054 = vmatpush.bf16.msra.mxu0 %v390
  %1055 = vmatpush.bf16.msra.mxu0 %v386
  %1056 = vmatmul.bf16.gmra.mxu0 %v1021
  %v1057 = vpop.f32.mrf.mxu0
  %v1058 = vadd.f32 0.0, %v1057
  %v1059 = vpop.f32.mrf.mxu0
  %1060 = vdwg.mxu0
  %1061 = vmatpush.bf16.msra.mxu0 %v415
  %1062 = vmatpush.bf16.msra.mxu0 %v411
  %1063 = vmatpush.bf16.msra.mxu0 %v407
  %1064 = vmatpush.bf16.msra.mxu0 %v403
  %1065 = vmatpush.bf16.msra.mxu0 %v399
  %1066 = vmatpush.bf16.msra.mxu0 %v395
  %1067 = vmatpush.bf16.msra.mxu0 %v391
  %1068 = vmatpush.bf16.msra.mxu0 %v387
  %1069 = vmatmul.bf16.gmra.mxu0 %v1021
  %v1070 = vpop.f32.mrf.mxu0
  %v1071 = vadd.f32 0.0, %v1070
  %v1072 = vpop.f32.mrf.mxu0
  %1073 = vdwg.mxu0
  %v1074 = vadd.f32 %v1017, %v1032
  %v1075 = vadd.f32 %v1018, %v1045
  %v1076 = vadd.f32 %v1019, %v1058
  %v1077 = vadd.f32 %v1020, %v1071
  %v1078 = vmul.f32 %v1074, 0.5
  %v1079 = vtanh.pop %v1078
  %v1080 = vmul.f32 %v1079, 0.5
  %v1081 = vadd.f32 %v1080, 0.5
  %v1082 = vmul.f32 %v1075, 0.5
  %v1083 = vtanh.pop %v1082
  %v1084 = vmul.f32 %v1083, 0.5
  %v1085 = vadd.f32 %v1084, 0.5
  %v1086 = vtanh.pop %v1076
  %v1087 = vmul.f32 %v1077, 0.5
  %v1088 = vtanh.pop %v1087
  %v1089 = vmul.f32 %v1088, 0.5
  %v1090 = vadd.f32 %v1089, 0.5
  %v1091 = vmul.f32 %v1085, %v1011
  %v1092 = vmul.f32 %v1081, %v1086
  %v1093 = vadd.f32 %v1091, %v1092
  %v1094 = vtanh.pop %v1093
  %v1095 = vmul.f32 %v1090, %v1094
  %1096 = vst [vmem:[#allocation2] sm:$0xff] %v1095
  %1097 = vst [vmem:[#allocation3] sm:$0xff] %v1093
  // Predicated region
  $region26: #{dna_discriminator.1} parent=0 // pred_check
    %p1098 = pneg %p23
  $region27: #{dna_discriminator.1} parent=0 // pred_check_branch
    %1100 = sbr.rel (%p1098) target = $region29
  $region28: #{dna_discriminator.1} parent=0 // pred_region
    %v1101 = vld [vmem:[#allocation2] sm:$0xff]
    %v1102 = vld [vmem:[%s3] sm:$0xff]
    %v1103 = vld [vmem:[%s3 + $0x8] sm:$0xff]
    %v1104 = vld [vmem:[%s3 + $0x10] sm:$0xff]
    %v1105 = vld [vmem:[%s3 + $0x18] sm:$0xff]
    %v1106 = vld [vmem:[%s3 + $0x20] sm:$0xff]
    %v1107 = vld [vmem:[%s3 + $0x28] sm:$0xff]
    %v1108 = vld [vmem:[%s3 + $0x30] sm:$0xff]
    %v1109 = vld [vmem:[%s3 + $0x38] sm:$0xff]
    %v1110 = vld [vmem:[%s3 + $0x40] sm:$0xff]
    %v1111 = vld [vmem:[%s3 + $0x48] sm:$0xff]
    %v1112 = vld [vmem:[%s3 + $0x50] sm:$0xff]
    %v1113 = vld [vmem:[%s3 + $0x58] sm:$0xff]
    %v1114 = vld [vmem:[%s3 + $0x60] sm:$0xff]
    %v1115 = vld [vmem:[%s3 + $0x68] sm:$0xff]
    %v1116 = vld [vmem:[%s3 + $0x70] sm:$0xff]
    %v1117 = vld [vmem:[%s3 + $0x78] sm:$0xff]
    %v1118 = vld [vmem:[#allocation5] sm:$0x1]
    %v1120 = vperm.slane %v1118, 0
    %1122 = vmatpush.msra.mxu0 %v1117
    %1123 = vmatpush.msra.mxu0 %v1116
    %1124 = vmatpush.msra.mxu0 %v1115
    %1125 = vmatpush.msra.mxu0 %v1114
    %1126 = vmatpush.msra.mxu0 %v1113
    %1127 = vmatpush.msra.mxu0 %v1112
    %1128 = vmatpush.msra.mxu0 %v1111
    %1129 = vmatpush.msra.mxu0 %v1110
    %1130 = vmatpush.msra.mxu0 %v1109
    %1131 = vmatpush.msra.mxu0 %v1108
    %1132 = vmatpush.msra.mxu0 %v1107
    %1133 = vmatpush.msra.mxu0 %v1106
    %1134 = vmatpush.msra.mxu0 %v1105
    %1135 = vmatpush.msra.mxu0 %v1104
    %1136 = vmatpush.msra.mxu0 %v1103
    %1137 = vmatpush.msra.mxu0 %v1102
    %1138 = vmatmul.f32.gmra.mxu0 %v1101
    %v1139 = vpop.f32.mrf.mxu0
    %v1140 = vadd.f32 %v1120, %v1139
    %1141 = vdwg.mxu0
    %v1142 = vmul.f32 %v1140, 0.5
    %v1143 = vtanh.pop %v1142
    %v1144 = vmul.f32 %v1143, 0.5
    %v1145 = vadd.f32 %v1144, 0.5
    %vm1146 = vcmask 7168
    %1147 = vst.msk [vmem:[%s5] sm:$0xff] %vm1146, %v1145
  $region29: #{dna_discriminator.1} parent=0 // pred_fallthru
    _
  // Predicated region
  $region30: #{dna_discriminator.1} parent=0 // pred_check
    _
  $region31: #{dna_discriminator.1} parent=0 // pred_check_branch
    %1149 = sbr.rel (0) target = $region33
  $region32: #{dna_discriminator.1} parent=0 // pred_region
    _
  $region33: #{dna_discriminator.1} parent=0 // pred_fallthru
    _
  // Predicated region
  $region34: #{dna_discriminator.1} parent=0 // pred_check
    _
  $region35: #{dna_discriminator.1} parent=0 // pred_check_branch
    %1151 = sbr.rel (0) target = $region37
  $region36: #{dna_discriminator.1} parent=0 // pred_region
    _
  $region37: #{dna_discriminator.1} parent=0 // pred_fallthru
    _

</llo_original>
